<compile_context>
chip_gen: v7x
topology: tpu7x:2x2x1
jax: 0.10.0
libtpu: 0.0.40
codegen_flags: <defaults>
</compile_context>

<pallas_src>
import functools

import jax
import jax.numpy as jnp
from jax import lax
from jax.experimental import pallas as pl
from jax.experimental.pallas import tpu as pltpu


def _round_up(x, m):
    return (x + m - 1) // m * m


def _cgconv_block_kernel(src_ref, tgt_ref,                     # scalar prefetch (SMEM)
                         x_ref, ea_ref,                        # inputs
                         wi_ref, wj_ref, we_ref, b_ref,        # fused lin_f|lin_s weights
                         w1_ref, b1_ref,                       # FFW weights
                         out_ref,                              # output
                         agg_ref, xi_ref, xj_ref, m_ref,       # VMEM scratch
                         *, tile_e, n_pad, feat, compute_dtype):
    t = pl.program_id(0)
    base = t * tile_e

    # ---- init the segment-sum accumulator on the first edge tile ----------
    @pl.when(t == 0)
    def _():
        agg_ref[...] = jnp.zeros_like(agg_ref)

    # ---- real gather: x[src], x[tgt] rows -> edge-tile buffers (O(E*F)) ----
    # Indices come from SMEM (scalar prefetch); rows are copied with dynamic
    # second-minor indexing -- no [E, N] one-hot, no O(E*N*F) MXU work.
    def gather_body(e, carry):
        s = src_ref[base + e]
        d = tgt_ref[base + e]
        xj_ref[pl.ds(e, 1), :] = x_ref[pl.ds(s, 1), :]
        xi_ref[pl.ds(e, 1), :] = x_ref[pl.ds(d, 1), :]
        return carry

    lax.fori_loop(0, tile_e, gather_body, 0)

    # ---- fused lin_f | lin_s: one 2F-wide output per operand matmul --------
    xi = xi_ref[...].astype(compute_dtype)
    xj = xj_ref[...].astype(compute_dtype)
    ea = ea_ref[...]                                   # already in compute dtype
    fs = (jnp.dot(xi, wi_ref[...], preferred_element_type=jnp.float32)
          + jnp.dot(xj, wj_ref[...], preferred_element_type=jnp.float32)
          + jnp.dot(ea, we_ref[...], preferred_element_type=jnp.float32)
          + b_ref[...])                                # [tile_e, 2F], f32
    f = fs[:, :feat]
    s = fs[:, feat:]

    # gate = sigmoid(f) * softplus(s)   (transcendentals in f32 on the EUP)
    if compute_dtype == jnp.float32:
        gate = 1.0 / (1.0 + jnp.exp(-f))               # exact for tight check
    else:
        gate = pl.reciprocal(1.0 + jnp.exp(-f), approx=True)   # EUP vrcp
    softplus = jnp.maximum(s, 0.0) + jnp.log(1.0 + jnp.exp(-jnp.abs(s)))
    m_ref[...] = gate * softplus

    # ---- real scatter-add: accumulate messages into agg[tgt] ---------------
    # Padded edges were given tgt == n_pad, which points at the dump rows of
    # the accumulator, so no masking is needed.
    def scatter_body(e, carry):
        d = tgt_ref[base + e]
        agg_ref[pl.ds(d, 1), :] = (agg_ref[pl.ds(d, 1), :]
                                   + m_ref[pl.ds(e, 1), :])
        return carry

    lax.fori_loop(0, tile_e, scatter_body, 0)

    # ---- finalize on the last edge tile: residual + FFW (Linear + ReLU) ----
    # TODO(synk): MultiLayerPercetronLayer definition not available; assumed
    # Linear(F, F) + ReLU (no dropout / norm).
    @pl.when(t == pl.num_programs(0) - 1)
    def _():
        h = x_ref[...] + agg_ref[pl.ds(0, n_pad), :]
        y = (jnp.dot(h.astype(compute_dtype), w1_ref[...],
                     preferred_element_type=jnp.float32) + b1_ref[...])
        out_ref[...] = jnp.maximum(y, 0.0)


@functools.partial(jax.jit, static_argnames=("tile_e", "compute_dtype"))
def cgconv_block(x, edge_index, edge_attr, params, *,
                 tile_e=128, compute_dtype=jnp.float32):
    """x: [N, F] f32, edge_index: [2, E] int, edge_attr: [E, D] f32."""
    N, F = x.shape
    E, D = edge_attr.shape
    cd = compute_dtype

    n_pad = _round_up(N, 8)                       # sublane-aligned node count
    e_pad = _round_up(max(E, 1), tile_e)          # edge tiles of equal size
    n_tiles = e_pad // tile_e

    # Pad nodes with zero rows; pad edges so they scatter into dump rows
    # (row index n_pad) of the accumulator and never touch real nodes.
    xp = jnp.zeros((n_pad, F), jnp.float32).at[:N].set(x.astype(jnp.float32))
    src = jnp.zeros((e_pad,), jnp.int32).at[:E].set(edge_index[0].astype(jnp.int32))
    tgt = jnp.full((e_pad,), n_pad, jnp.int32).at[:E].set(edge_index[1].astype(jnp.int32))
    eap = jnp.zeros((e_pad, D), cd).at[:E].set(edge_attr.astype(cd))

    # Fuse lin_f | lin_s column-wise: three [*, 2F] weight slabs + one bias.
    wf, ws = params["wf"], params["ws"]
    wi = jnp.concatenate([wf[:F], ws[:F]], axis=1).astype(cd)          # [F, 2F]
    wj = jnp.concatenate([wf[F:2 * F], ws[F:2 * F]], axis=1).astype(cd)
    we = jnp.concatenate([wf[2 * F:], ws[2 * F:]], axis=1).astype(cd)  # [D, 2F]
    b = jnp.concatenate([params["bf"], params["bs"]], axis=1).astype(jnp.float32)
    w1 = params["w1"].astype(cd)
    b1 = params["b1"].astype(jnp.float32)

    kernel = functools.partial(_cgconv_block_kernel, tile_e=tile_e,
                               n_pad=n_pad, feat=F, compute_dtype=cd)

    full = lambda t, s_, d_: (0, 0)   # resident blocks (x, weights, output)
    grid_spec = pltpu.PrefetchScalarGridSpec(
        num_scalar_prefetch=2,                       # src, tgt -> SMEM
        grid=(n_tiles,),
        in_specs=[
            pl.BlockSpec((n_pad, F), full),                      # x (resident)
            pl.BlockSpec((tile_e, D), lambda t, s_, d_: (t, 0)),  # edge_attr (pipelined)
            pl.BlockSpec((F, 2 * F), full),                      # wi
            pl.BlockSpec((F, 2 * F), full),                      # wj
            pl.BlockSpec((D, 2 * F), full),                      # we
            pl.BlockSpec((1, 2 * F), full),                      # fused bias
            pl.BlockSpec((F, F), full),                          # w1
            pl.BlockSpec((1, F), full),                          # b1
        ],
        out_specs=pl.BlockSpec((n_pad, F), full),
        scratch_shapes=[
            pltpu.VMEM((n_pad + 8, F), jnp.float32),   # agg (+ dump rows)
            pltpu.VMEM((tile_e, F), jnp.float32),      # gathered x_i
            pltpu.VMEM((tile_e, F), jnp.float32),      # gathered x_j
            pltpu.VMEM((tile_e, F), jnp.float32),      # messages m
        ],
    )

    itemsize = jnp.dtype(cd).itemsize
    cost = pl.CostEstimate(
        flops=2 * e_pad * (2 * F) * (2 * F + D) + 2 * n_pad * F * F,
        transcendentals=3 * e_pad * F,
        bytes_accessed=(2 * n_pad * F * 4                 # x + out
                        + e_pad * D * itemsize            # edge_attr
                        + 2 * e_pad * 4                   # indices
                        + ((2 * F + D) * 2 * F + F * F) * itemsize),
    )

    out = pl.pallas_call(
        kernel,
        out_shape=jax.ShapeDtypeStruct((n_pad, F), jnp.float32),
        grid_spec=grid_spec,
        compiler_params=pltpu.CompilerParams(
            # Single grid axis carries the accumulator -> "arbitrary".
            dimension_semantics=("arbitrary",),
            vmem_limit_bytes=48 * 1024 * 1024,
        ),
        cost_estimate=cost,
    )(src, tgt, xp, eap, wi, wj, we, b, w1, b1)

    return out[:N]


def init_params(key, F, D):
    """Deterministic synthetic init (PyTorch Linear-like uniform scaling)."""
    ks = jax.random.split(key, 6)
    zdim = 2 * F + D
    lim_z = 1.0 / jnp.sqrt(zdim)
    lim_f = 1.0 / jnp.sqrt(F)
    return {
        "wf": jax.random.uniform(ks[0], (zdim, F), jnp.float32, -lim_z, lim_z),
        "bf": jax.random.uniform(ks[1], (1, F), jnp.float32, -lim_z, lim_z),
        "ws": jax.random.uniform(ks[2], (zdim, F), jnp.float32, -lim_z, lim_z),
        "bs": jax.random.uniform(ks[3], (1, F), jnp.float32, -lim_z, lim_z),
        "w1": jax.random.uniform(ks[4], (F, F), jnp.float32, -lim_f, lim_f),
        "b1": jax.random.uniform(ks[5], (1, F), jnp.float32, -lim_f, lim_f),
    }


def reference(x, edge_index, edge_attr, params, compute_dtype=jnp.float32):
    """Pure-JAX reference of CGConvBlock forward (same operand rounding)."""
    N, F = x.shape
    src, tgt = edge_index[0], edge_index[1]
    cd = compute_dtype
    z = jnp.concatenate([x[tgt], x[src], edge_attr], axis=-1)
    f = jnp.dot(z.astype(cd), params["wf"].astype(cd),
                preferred_element_type=jnp.float32) + params["bf"]
    s = jnp.dot(z.astype(cd), params["ws"].astype(cd),
                preferred_element_type=jnp.float32) + params["bs"]
    m = jax.nn.sigmoid(f) * jax.nn.softplus(s)
    agg = jax.ops.segment_sum(m, tgt, num_segments=N)
    h = agg + x
    y = jnp.dot(h.astype(cd), params["w1"].astype(cd),
                preferred_element_type=jnp.float32) + params["b1"]
    return jnp.maximum(y, 0.0)


if __name__ == "__main__":
    # Lane-dense sizes per the perf review: F multiple of 128 (2F = 256 fills
    # the MXU), E a multiple of the edge tile.
    N = 128      # nodes
    F = 128      # input_channels
    D = 64       # num_edge_features
    E = 512      # edges
    TILE_E = 128

    key = jax.random.PRNGKey(0)
    kx, ke, ks_, kt, kp = jax.random.split(key, 5)
    x = jax.random.normal(kx, (N, F), jnp.float32)
    edge_attr = jax.random.normal(ke, (E, D), jnp.float32)
    src = jax.random.randint(ks_, (E,), 0, N, jnp.int32)
    tgt = jax.random.randint(kt, (E,), 0, N, jnp.int32)
    edge_index = jnp.stack([src, tgt], axis=0)
    params = init_params(kp, F, D)

    # Exact f32 run (tight correctness check of gather/scatter/linears).
    out32 = jax.block_until_ready(
        cgconv_block(x, edge_index, edge_attr, params,
                     tile_e=TILE_E, compute_dtype=jnp.float32))
    ref32 = reference(x, edge_index, edge_attr, params, jnp.float32)
    assert jnp.allclose(out32, ref32, rtol=1e-4, atol=1e-4), (
        float(jnp.max(jnp.abs(out32 - ref32))))

    # bf16-operand run (recommended v6e/v7x MXU config, f32 accumulation,
    # approximate EUP reciprocal in the gate) -> looser tolerance.
    out16 = jax.block_until_ready(
        cgconv_block(x, edge_index, edge_attr, params,
                     tile_e=TILE_E, compute_dtype=jnp.bfloat16))
    ref16 = reference(x, edge_index, edge_attr, params, jnp.bfloat16)
    assert jnp.allclose(out16, ref16, rtol=5e-2, atol=5e-2), (
        float(jnp.max(jnp.abs(out16 - ref16))))

    print("KERNEL_OK")
</pallas_src>

<mosaic_0001>
module attributes {stable_mosaic.version = 11 : i64} {
  func.func @_cgconv_block_kernel(%arg0: i32, %arg1: memref<512xi32, #tpu.memory_space<smem>>, %arg2: memref<512xi32, #tpu.memory_space<smem>>, %arg3: memref<128x128xf32, #tpu.memory_space<vmem>>, %arg4: memref<128x64xf32, #tpu.memory_space<vmem>>, %arg5: memref<128x256xf32, #tpu.memory_space<vmem>>, %arg6: memref<128x256xf32, #tpu.memory_space<vmem>>, %arg7: memref<64x256xf32, #tpu.memory_space<vmem>>, %arg8: memref<1x256xf32, #tpu.memory_space<vmem>>, %arg9: memref<128x128xf32, #tpu.memory_space<vmem>>, %arg10: memref<1x128xf32, #tpu.memory_space<vmem>>, %arg11: memref<128x128xf32, #tpu.memory_space<vmem>>, %arg12: memref<136x128xf32, #tpu.memory_space<vmem>>, %arg13: memref<128x128xf32, #tpu.memory_space<vmem>>, %arg14: memref<128x128xf32, #tpu.memory_space<vmem>>, %arg15: memref<128x128xf32, #tpu.memory_space<vmem>>) attributes {dimension_semantics = [#tpu.dimension_semantics<arbitrary>], iteration_bounds = array<i64: 4>, scalar_prefetch = 2 : i64, scratch_operands = 4 : i64, tpu.core_type = #tpu.core_type<tc>, window_params = [{pipeline_mode = #tpu.pipeline_mode<synchronous>, transform_indices = @transform_0, window_bounds = array<i64: 128, 128>}, {transform_indices = @transform_1, window_bounds = array<i64: 128, 64>}, {pipeline_mode = #tpu.pipeline_mode<synchronous>, transform_indices = @transform_2, window_bounds = array<i64: 128, 256>}, {pipeline_mode = #tpu.pipeline_mode<synchronous>, transform_indices = @transform_3, window_bounds = array<i64: 128, 256>}, {pipeline_mode = #tpu.pipeline_mode<synchronous>, transform_indices = @transform_4, window_bounds = array<i64: 64, 256>}, {pipeline_mode = #tpu.pipeline_mode<synchronous>, transform_indices = @transform_5, window_bounds = array<i64: 1, 256>}, {pipeline_mode = #tpu.pipeline_mode<synchronous>, transform_indices = @transform_6, window_bounds = array<i64: 128, 128>}, {pipeline_mode = #tpu.pipeline_mode<synchronous>, transform_indices = @transform_7, window_bounds = array<i64: 1, 128>}, {pipeline_mode = #tpu.pipeline_mode<synchronous>, transform_indices = @transform_8, window_bounds = array<i64: 128, 128>}]} {
    %c128_i32 = arith.constant 128 : i32
    %0 = arith.muli %arg0, %c128_i32 : i32
    %c0_i32 = arith.constant 0 : i32
    %1 = arith.cmpi eq, %arg0, %c0_i32 : i32
    %2 = arith.extui %1 : i1 to i32
    %c0_i32_0 = arith.constant 0 : i32
    %3 = arith.cmpi ne, %2, %c0_i32_0 : i32
    scf.if %3 {
      %cst_32 = arith.constant 0.000000e+00 : f32
      %44 = vector.broadcast %cst_32 : f32 to vector<136x128xf32>
      %c0_33 = arith.constant 0 : index
      %c0_34 = arith.constant 0 : index
      %45 = vector.load %arg12[%c0_33, %c0_34] : memref<136x128xf32, #tpu.memory_space<vmem>>, vector<136x128xf32>
      tpu.vector_store %arg12[%c0_33, %c0_34], %44 {strides = array<i32>} : memref<136x128xf32, #tpu.memory_space<vmem>>, vector<136x128xf32>,
    } else {
    }
    %c0_i32_1 = arith.constant 0 : i32
    %c128_i32_2 = arith.constant 128 : i32
    %4 = arith.addi %c0_i32_1, %c128_i32_2 : i32
    %c1_i32 = arith.constant 1 : i32
    scf.for %arg16 = %c0_i32_1 to %4 step %c1_i32  : i32 {
      %44 = arith.addi %0, %arg16 : i32
      %45 = arith.index_cast %44 : i32 to index
      %46 = memref.load %arg1[%45] : memref<512xi32, #tpu.memory_space<smem>>
      %47 = arith.addi %0, %arg16 : i32
      %48 = arith.index_cast %47 : i32 to index
      %49 = memref.load %arg2[%48] : memref<512xi32, #tpu.memory_space<smem>>
      %50 = arith.index_cast %46 : i32 to index
      %c0_32 = arith.constant 0 : index
      %51 = vector.load %arg3[%50, %c0_32] : memref<128x128xf32, #tpu.memory_space<vmem>>, vector<1x128xf32>
      %52 = arith.index_cast %arg16 : i32 to index
      %c0_33 = arith.constant 0 : index
      %53 = vector.load %arg14[%52, %c0_33] : memref<128x128xf32, #tpu.memory_space<vmem>>, vector<1x128xf32>
      tpu.vector_store %arg14[%52, %c0_33], %51 {strides = array<i32>} : memref<128x128xf32, #tpu.memory_space<vmem>>, vector<1x128xf32>,
      %54 = arith.index_cast %49 : i32 to index
      %c0_34 = arith.constant 0 : index
      %55 = vector.load %arg3[%54, %c0_34] : memref<128x128xf32, #tpu.memory_space<vmem>>, vector<1x128xf32>
      %56 = arith.index_cast %arg16 : i32 to index
      %c0_35 = arith.constant 0 : index
      %57 = vector.load %arg13[%56, %c0_35] : memref<128x128xf32, #tpu.memory_space<vmem>>, vector<1x128xf32>
      tpu.vector_store %arg13[%56, %c0_35], %55 {strides = array<i32>} : memref<128x128xf32, #tpu.memory_space<vmem>>, vector<1x128xf32>,
    }
    %c128_i32_3 = arith.constant 128 : i32
    %c0 = arith.constant 0 : index
    %c0_4 = arith.constant 0 : index
    %5 = vector.load %arg13[%c0, %c0_4] : memref<128x128xf32, #tpu.memory_space<vmem>>, vector<128x128xf32>
    %c0_5 = arith.constant 0 : index
    %c0_6 = arith.constant 0 : index
    %6 = vector.load %arg14[%c0_5, %c0_6] : memref<128x128xf32, #tpu.memory_space<vmem>>, vector<128x128xf32>
    %c0_7 = arith.constant 0 : index
    %c0_8 = arith.constant 0 : index
    %7 = vector.load %arg4[%c0_7, %c0_8] : memref<128x64xf32, #tpu.memory_space<vmem>>, vector<128x64xf32>
    %c0_9 = arith.constant 0 : index
    %c0_10 = arith.constant 0 : index
    %8 = vector.load %arg5[%c0_9, %c0_10] : memref<128x256xf32, #tpu.memory_space<vmem>>, vector<128x256xf32>
    %cst = arith.constant dense<0.000000e+00> : vector<128x256xf32>
    %9 = tpu.matmul %5, %8, %cst {dimension_numbers = #tpu.dot_dimension_numbers<[1], [0], [0], [1], [0, 0, 1, 1], [], []>} : vector<128x128xf32>, vector<128x256xf32>, vector<128x256xf32> -> vector<128x256xf32>
    %c0_11 = arith.constant 0 : index
    %c0_12 = arith.constant 0 : index
    %10 = vector.load %arg6[%c0_11, %c0_12] : memref<128x256xf32, #tpu.memory_space<vmem>>, vector<128x256xf32>
    %cst_13 = arith.constant dense<0.000000e+00> : vector<128x256xf32>
    %11 = tpu.matmul %6, %10, %cst_13 {dimension_numbers = #tpu.dot_dimension_numbers<[1], [0], [0], [1], [0, 0, 1, 1], [], []>} : vector<128x128xf32>, vector<128x256xf32>, vector<128x256xf32> -> vector<128x256xf32>
    %12 = arith.addf %9, %11 : vector<128x256xf32>
    %c0_14 = arith.constant 0 : index
    %c0_15 = arith.constant 0 : index
    %13 = vector.load %arg7[%c0_14, %c0_15] : memref<64x256xf32, #tpu.memory_space<vmem>>, vector<64x256xf32>
    %cst_16 = arith.constant dense<0.000000e+00> : vector<128x256xf32>
    %14 = tpu.matmul %7, %13, %cst_16 {dimension_numbers = #tpu.dot_dimension_numbers<[1], [0], [0], [1], [0, 0, 1, 1], [], []>} : vector<128x64xf32>, vector<64x256xf32>, vector<128x256xf32> -> vector<128x256xf32>
    %15 = arith.addf %12, %14 : vector<128x256xf32>
    %c0_17 = arith.constant 0 : index
    %c0_18 = arith.constant 0 : index
    %16 = vector.load %arg8[%c0_17, %c0_18] : memref<1x256xf32, #tpu.memory_space<vmem>>, vector<1x256xf32>
    %17 = vector.broadcast %16 : vector<1x256xf32> to vector<128x256xf32>
    %18 = arith.addf %15, %17 : vector<128x256xf32>
    %19 = vector.extract_strided_slice %18 {offsets = [0, 0], sizes = [128, 128], strides = [1, 1]} : vector<128x256xf32> to vector<128x128xf32>
    %20 = vector.extract_strided_slice %18 {offsets = [0, 128], sizes = [128, 128], strides = [1, 1]} : vector<128x256xf32> to vector<128x128xf32>
    %cst_19 = arith.constant 0.000000e+00 : f32
    %21 = vector.broadcast %cst_19 : f32 to vector<128x128xf32>
    %22 = arith.subf %21, %19 : vector<128x128xf32>
    %23 = math.exp %22 : vector<128x128xf32>
    %cst_20 = arith.constant 1.000000e+00 : f32
    %24 = vector.broadcast %cst_20 : f32 to vector<128x128xf32>
    %25 = arith.addf %24, %23 : vector<128x128xf32>
    %cst_21 = arith.constant 1.000000e+00 : f32
    %26 = vector.broadcast %cst_21 : f32 to vector<128x128xf32>
    %27 = arith.divf %26, %25 : vector<128x128xf32>
    %cst_22 = arith.constant 0.000000e+00 : f32
    %28 = vector.broadcast %cst_22 : f32 to vector<128x128xf32>
    %29 = arith.maximumf %20, %28 : vector<128x128xf32>
    %30 = math.absf %20 : vector<128x128xf32>
    %cst_23 = arith.constant 0.000000e+00 : f32
    %31 = vector.broadcast %cst_23 : f32 to vector<128x128xf32>
    %32 = arith.subf %31, %30 : vector<128x128xf32>
    %33 = math.exp %32 : vector<128x128xf32>
    %cst_24 = arith.constant 1.000000e+00 : f32
    %34 = vector.broadcast %cst_24 : f32 to vector<128x128xf32>
    %35 = arith.addf %34, %33 : vector<128x128xf32>
    %36 = math.log %35 : vector<128x128xf32>
    %37 = arith.addf %29, %36 : vector<128x128xf32>
    %38 = arith.mulf %27, %37 : vector<128x128xf32>
    %c0_25 = arith.constant 0 : index
    %c0_26 = arith.constant 0 : index
    %39 = vector.load %arg15[%c0_25, %c0_26] : memref<128x128xf32, #tpu.memory_space<vmem>>, vector<128x128xf32>
    tpu.vector_store %arg15[%c0_25, %c0_26], %38 {strides = array<i32>} : memref<128x128xf32, #tpu.memory_space<vmem>>, vector<128x128xf32>,
    %c0_i32_27 = arith.constant 0 : i32
    %c128_i32_28 = arith.constant 128 : i32
    %40 = arith.addi %c0_i32_27, %c128_i32_28 : i32
    %c1_i32_29 = arith.constant 1 : i32
    scf.for %arg16 = %c0_i32_27 to %40 step %c1_i32_29  : i32 {
      %44 = arith.addi %0, %arg16 : i32
      %45 = arith.index_cast %44 : i32 to index
      %46 = memref.load %arg2[%45] : memref<512xi32, #tpu.memory_space<smem>>
      %47 = arith.index_cast %46 : i32 to index
      %c0_32 = arith.constant 0 : index
      %48 = vector.load %arg12[%47, %c0_32] : memref<136x128xf32, #tpu.memory_space<vmem>>, vector<1x128xf32>
      %49 = arith.index_cast %arg16 : i32 to index
      %c0_33 = arith.constant 0 : index
      %50 = vector.load %arg15[%49, %c0_33] : memref<128x128xf32, #tpu.memory_space<vmem>>, vector<1x128xf32>
      %51 = arith.addf %48, %50 : vector<1x128xf32>
      %52 = arith.index_cast %46 : i32 to index
      %c0_34 = arith.constant 0 : index
      %53 = vector.load %arg12[%52, %c0_34] : memref<136x128xf32, #tpu.memory_space<vmem>>, vector<1x128xf32>
      tpu.vector_store %arg12[%52, %c0_34], %51 {strides = array<i32>} : memref<136x128xf32, #tpu.memory_space<vmem>>, vector<1x128xf32>,
    }
    %c128_i32_30 = arith.constant 128 : i32
    %c3_i32 = arith.constant 3 : i32
    %41 = arith.cmpi eq, %arg0, %c3_i32 : i32
    %42 = arith.extui %41 : i1 to i32
    %c0_i32_31 = arith.constant 0 : i32
    %43 = arith.cmpi ne, %42, %c0_i32_31 : i32
    scf.if %43 {
      %c0_32 = arith.constant 0 : index
      %c0_33 = arith.constant 0 : index
      %44 = vector.load %arg3[%c0_32, %c0_33] : memref<128x128xf32, #tpu.memory_space<vmem>>, vector<128x128xf32>
      %c0_34 = arith.constant 0 : index
      %c0_35 = arith.constant 0 : index
      %45 = vector.load %arg12[%c0_34, %c0_35] : memref<136x128xf32, #tpu.memory_space<vmem>>, vector<128x128xf32>
      %46 = arith.addf %44, %45 : vector<128x128xf32>
      %c0_36 = arith.constant 0 : index
      %c0_37 = arith.constant 0 : index
      %47 = vector.load %arg9[%c0_36, %c0_37] : memref<128x128xf32, #tpu.memory_space<vmem>>, vector<128x128xf32>
      %cst_38 = arith.constant dense<0.000000e+00> : vector<128x128xf32>
      %48 = tpu.matmul %46, %47, %cst_38 {dimension_numbers = #tpu.dot_dimension_numbers<[1], [0], [0], [1], [0, 0, 1, 1], [], []>} : vector<128x128xf32>, vector<128x128xf32>, vector<128x128xf32> -> vector<128x128xf32>
      %c0_39 = arith.constant 0 : index
      %c0_40 = arith.constant 0 : index
      %49 = vector.load %arg10[%c0_39, %c0_40] : memref<1x128xf32, #tpu.memory_space<vmem>>, vector<1x128xf32>
      %50 = vector.broadcast %49 : vector<1x128xf32> to vector<128x128xf32>
      %51 = arith.addf %48, %50 : vector<128x128xf32>
      %cst_41 = arith.constant 0.000000e+00 : f32
      %52 = vector.broadcast %cst_41 : f32 to vector<128x128xf32>
      %53 = arith.maximumf %51, %52 : vector<128x128xf32>
      %c0_42 = arith.constant 0 : index
      %c0_43 = arith.constant 0 : index
      %54 = vector.load %arg11[%c0_42, %c0_43] : memref<128x128xf32, #tpu.memory_space<vmem>>, vector<128x128xf32>
      tpu.vector_store %arg11[%c0_42, %c0_43], %53 {strides = array<i32>} : memref<128x128xf32, #tpu.memory_space<vmem>>, vector<128x128xf32>,
    } else {
    }
    return
  }
  func.func @transform_0(%arg0: i32, %arg1: memref<512xi32, #tpu.memory_space<smem>>, %arg2: memref<512xi32, #tpu.memory_space<smem>>) -> (i32, i32) {
    %c0_i32 = arith.constant 0 : i32
    %c0_i32_0 = arith.constant 0 : i32
    %c0_i32_1 = arith.constant 0 : i32
    return %c0_i32, %c0_i32_0 : i32, i32
  }
  func.func @transform_1(%arg0: i32, %arg1: memref<512xi32, #tpu.memory_space<smem>>, %arg2: memref<512xi32, #tpu.memory_space<smem>>) -> (i32, i32) {
    %c0_i32 = arith.constant 0 : i32
    %c0_i32_0 = arith.constant 0 : i32
    return %arg0, %c0_i32 : i32, i32
  }
  func.func @transform_2(%arg0: i32, %arg1: memref<512xi32, #tpu.memory_space<smem>>, %arg2: memref<512xi32, #tpu.memory_space<smem>>) -> (i32, i32) {
    %c0_i32 = arith.constant 0 : i32
    %c0_i32_0 = arith.constant 0 : i32
    %c0_i32_1 = arith.constant 0 : i32
    return %c0_i32, %c0_i32_0 : i32, i32
  }
  func.func @transform_3(%arg0: i32, %arg1: memref<512xi32, #tpu.memory_space<smem>>, %arg2: memref<512xi32, #tpu.memory_space<smem>>) -> (i32, i32) {
    %c0_i32 = arith.constant 0 : i32
    %c0_i32_0 = arith.constant 0 : i32
    %c0_i32_1 = arith.constant 0 : i32
    return %c0_i32, %c0_i32_0 : i32, i32
  }
  func.func @transform_4(%arg0: i32, %arg1: memref<512xi32, #tpu.memory_space<smem>>, %arg2: memref<512xi32, #tpu.memory_space<smem>>) -> (i32, i32) {
    %c0_i32 = arith.constant 0 : i32
    %c0_i32_0 = arith.constant 0 : i32
    %c0_i32_1 = arith.constant 0 : i32
    return %c0_i32, %c0_i32_0 : i32, i32
  }
  func.func @transform_5(%arg0: i32, %arg1: memref<512xi32, #tpu.memory_space<smem>>, %arg2: memref<512xi32, #tpu.memory_space<smem>>) -> (i32, i32) {
    %c0_i32 = arith.constant 0 : i32
    %c0_i32_0 = arith.constant 0 : i32
    %c0_i32_1 = arith.constant 0 : i32
    return %c0_i32, %c0_i32_0 : i32, i32
  }
  func.func @transform_6(%arg0: i32, %arg1: memref<512xi32, #tpu.memory_space<smem>>, %arg2: memref<512xi32, #tpu.memory_space<smem>>) -> (i32, i32) {
    %c0_i32 = arith.constant 0 : i32
    %c0_i32_0 = arith.constant 0 : i32
    %c0_i32_1 = arith.constant 0 : i32
    return %c0_i32, %c0_i32_0 : i32, i32
  }
  func.func @transform_7(%arg0: i32, %arg1: memref<512xi32, #tpu.memory_space<smem>>, %arg2: memref<512xi32, #tpu.memory_space<smem>>) -> (i32, i32) {
    %c0_i32 = arith.constant 0 : i32
    %c0_i32_0 = arith.constant 0 : i32
    %c0_i32_1 = arith.constant 0 : i32
    return %c0_i32, %c0_i32_0 : i32, i32
  }
  func.func @transform_8(%arg0: i32, %arg1: memref<512xi32, #tpu.memory_space<smem>>, %arg2: memref<512xi32, #tpu.memory_space<smem>>) -> (i32, i32) {
    %c0_i32 = arith.constant 0 : i32
    %c0_i32_0 = arith.constant 0 : i32
    %c0_i32_1 = arith.constant 0 : i32
    return %c0_i32, %c0_i32_0 : i32, i32
  }
}

</mosaic_0001>

<llo_original>
// kernel: cgconv_block.1
$region0: #{cgconv_block.1}
  #allocation0 [shape = 'u32[]', space=smem, size = 0x4, offset = 0x4, fixed_abs, tag = 'smem constant byte address 0x4 - core index']
  #allocation1 [shape = 'u32[144,128]{1,0:T(1,128)}', space=vmem, size = 0x12000, scoped, tag = 'internal scratch']
  #allocation2 [shape = 'f32[136,128]{1,0:T(8,128)}', space=vmem, size = 0x11000, scoped, tag = 'scratch operand']
  #allocation3 [shape = 'f32[128,128]{1,0:T(8,128)}', space=vmem, size = 0x10000, scoped, tag = 'scratch operand']
  #allocation4 [shape = 'f32[128,128]{1,0:T(8,128)}', space=vmem, size = 0x10000, scoped, tag = 'scratch operand']
  #allocation5 [shape = 'f32[128,128]{1,0:T(8,128)}', space=vmem, size = 0x10000, scoped, tag = 'scratch operand']
  #allocation6 [shape = 's32[1]{0}', space=sflag, size = 0x4, scoped, tag = 'scoped memory for cgconv_block.1']
  #allocation7 [shape = 'u8[2048]{0}', space=smem, size = 0x800, scoped, tag = 'prefetched SMEM operand 0']
  #allocation8 [shape = 'u8[2048]{0}', space=smem, size = 0x800, scoped, tag = 'prefetched SMEM operand 1']
  %s0 = inlined_call_operand.vmem [shape: s32[512], index: 0, kind: input, shape index: {}]
  %s1 = inlined_call_operand.vmem [shape: s32[512], index: 1, kind: input, shape index: {}]
  %s2 = inlined_call_operand.vmem [shape: f32[128,128], index: 2, kind: input, shape index: {}]
  %s3 = inlined_call_operand.vmem [shape: f32[512,64], index: 3, kind: input, shape index: {}]
  %s4 = inlined_call_operand.vmem [shape: f32[128,256], index: 4, kind: input, shape index: {}]
  %s5 = inlined_call_operand.vmem [shape: f32[128,256], index: 5, kind: input, shape index: {}]
  %s6 = inlined_call_operand.vmem [shape: f32[64,256], index: 6, kind: input, shape index: {}]
  %s7 = inlined_call_operand.vmem [shape: f32[1,256], index: 7, kind: input, shape index: {}]
  %s8 = inlined_call_operand.vmem [shape: f32[128,128], index: 8, kind: input, shape index: {}]
  %s9 = inlined_call_operand.vmem [shape: f32[1,128], index: 9, kind: input, shape index: {}]
  %s10 = inlined_call_operand.hbm [shape: f32[128,128], index: 10, kind: output, shape index: {}]
  %s11 = sld [smem:[#allocation0]]
  $region87: #{cgconv_block.1} parent=0
    _
  %s13 = ssub.s32 1, %s11
  %s14 = scalar_select 0, %s13, %s11
  %s15 = sshll.u32 %s0, 4
  %s16 = int_to_ptr.vmem [resolvable:$true] %s15
  %18 = dma.vmem_to_smem %s16, 64, [#allocation7], [#allocation6]
  %s19 = sshll.u32 %s1, 4
  %s20 = int_to_ptr.vmem [resolvable:$true] %s19
  %22 = dma.vmem_to_smem %s20, 64, [#allocation8], [#allocation6]
  %23 = dma.done [#allocation6], 128
  %24 = sfence
  $region1: #{cgconv_block.1} parent=0
    #allocation9 [shape = 'u8[65536]{0}', space=vmem, size = 0x10000, scoped, tag = 'output window, operand 0, single buffered']
    #allocation10 [shape = 's32[2]{0}', space=sflag, size = 0x8, scoped, tag = 'scoped memory for cgconv_block.1']
    %25 = vsyncpa [#allocation10], 0
    loop: start=0, step=1, limit=6
    $region2: #{cgconv_block.1} parent=1 // loop_pre_header
      _
    $region3: #{cgconv_block.1} parent=1 // loop_header
      %s27 = sphi 0, %s31
      %p28 = scmp.ge.s32.totalorder %s27, 6
      %s35 = sphi 0, %s35
      %s37 = sphi 0, %s35
      %s38 = sphi 0, %s37
      %s52 = sphi 0, %s38
      %s58 = sphi 0, %s60
      %s61 = sphi 0, %s58
      %s62 = sphi 0, %s61
      %s78 = sphi 0, %s62
      %s82 = sphi 0, %s82
      %s84 = sphi 0, %s82
      %s85 = sphi 0, %s84
      %s99 = sphi 0, %s85
      %s103 = sphi 0, %s103
      %s105 = sphi 0, %s103
      %s106 = sphi 0, %s105
      %s120 = sphi 0, %s106
      %s124 = sphi 0, %s124
      %s126 = sphi 0, %s124
      %s127 = sphi 0, %s126
      %s141 = sphi 0, %s127
      %s145 = sphi 0, %s145
      %s147 = sphi 0, %s145
      %s148 = sphi 0, %s147
      %s162 = sphi 0, %s148
      %s166 = sphi 0, %s166
      %s168 = sphi 0, %s166
      %s169 = sphi 0, %s168
      %s183 = sphi 0, %s169
      %s187 = sphi 0, %s187
      %s189 = sphi 0, %s187
      %s190 = sphi 0, %s189
      %s204 = sphi 0, %s190
      %s208 = sphi 0, %s208
      %s210 = sphi 0, %s208
      %s211 = sphi 0, %s210
      %s225 = sphi 0, %s211
    $region4: #{cgconv_block.1} parent=1 // loop_header_branch
      %30 = sbr.rel (%p28) target = $region8
    $region5: #{cgconv_block.1} parent=1 // loop_body
      %s32 = ssub.s32 %s27, 1
      %s33 = ssub.s32 %s27, 2
      %s34 = sadd.s32 %s27, 1
      %s36 = sadd.s32 %s35, 1
      %p39 = scmp.eq.s32.totalorder %s27, 3
      %p40 = scmp.ne.s32.totalorder %s35, %s37
      %p41 = scmp.eq.s32.totalorder %s27, 0
      %p42 = por %p40, %p41
      %p43 = scmp.ne.s32.totalorder %s35, %s37
      %p44 = scmp.eq.s32.totalorder %s32, 3
      %p45 = por %p43, %p44
      %p46 = scmp.ne.s32.totalorder %s37, %s38
      %p47 = scmp.eq.s32.totalorder %s32, 0
      %p48 = por %p46, %p47
      %p49 = scmp.ne.s32.totalorder %s37, %s38
      %p50 = scmp.eq.s32.totalorder %s33, 3
      %p51 = por %p49, %p50
      %p53 = scmp.ne.s32.totalorder %s38, %s52
      %p54 = scmp.eq.s32.totalorder %s33, 0
      %p55 = por %p53, %p54
      %s56 = ssub.s32 %s27, %s34
      %p57 = scmp.eq.s32.totalorder %s56, 0
      %s59 = sadd.s32 %s58, 1
      %s60 = scalar_select %p57, %s58, %s59
      %p63 = pneg %p57
      %p64 = scmp.eq.s32.totalorder %s27, 3
      %p65 = por %p63, %p64
      %p66 = scmp.ne.s32.totalorder %s58, %s61
      %p67 = scmp.eq.s32.totalorder %s27, 0
      %p68 = por %p66, %p67
      %p69 = scmp.ne.s32.totalorder %s58, %s61
      %p70 = scmp.eq.s32.totalorder %s32, 3
      %p71 = por %p69, %p70
      %p72 = scmp.ne.s32.totalorder %s61, %s62
      %p73 = scmp.eq.s32.totalorder %s32, 0
      %p74 = por %p72, %p73
      %p75 = scmp.ne.s32.totalorder %s61, %s62
      %p76 = scmp.eq.s32.totalorder %s33, 3
      %p77 = por %p75, %p76
      %p79 = scmp.ne.s32.totalorder %s62, %s78
      %p80 = scmp.eq.s32.totalorder %s33, 0
      %p81 = por %p79, %p80
      %s83 = sadd.s32 %s82, 1
      %p86 = scmp.eq.s32.totalorder %s27, 3
      %p87 = scmp.ne.s32.totalorder %s82, %s84
      %p88 = scmp.eq.s32.totalorder %s27, 0
      %p89 = por %p87, %p88
      %p90 = scmp.ne.s32.totalorder %s82, %s84
      %p91 = scmp.eq.s32.totalorder %s32, 3
      %p92 = por %p90, %p91
      %p93 = scmp.ne.s32.totalorder %s84, %s85
      %p94 = scmp.eq.s32.totalorder %s32, 0
      %p95 = por %p93, %p94
      %p96 = scmp.ne.s32.totalorder %s84, %s85
      %p97 = scmp.eq.s32.totalorder %s33, 3
      %p98 = por %p96, %p97
      %p100 = scmp.ne.s32.totalorder %s85, %s99
      %p101 = scmp.eq.s32.totalorder %s33, 0
      %p102 = por %p100, %p101
      %s104 = sadd.s32 %s103, 1
      %p107 = scmp.eq.s32.totalorder %s27, 3
      %p108 = scmp.ne.s32.totalorder %s103, %s105
      %p109 = scmp.eq.s32.totalorder %s27, 0
      %p110 = por %p108, %p109
      %p111 = scmp.ne.s32.totalorder %s103, %s105
      %p112 = scmp.eq.s32.totalorder %s32, 3
      %p113 = por %p111, %p112
      %p114 = scmp.ne.s32.totalorder %s105, %s106
      %p115 = scmp.eq.s32.totalorder %s32, 0
      %p116 = por %p114, %p115
      %p117 = scmp.ne.s32.totalorder %s105, %s106
      %p118 = scmp.eq.s32.totalorder %s33, 3
      %p119 = por %p117, %p118
      %p121 = scmp.ne.s32.totalorder %s106, %s120
      %p122 = scmp.eq.s32.totalorder %s33, 0
      %p123 = por %p121, %p122
      %s125 = sadd.s32 %s124, 1
      %p128 = scmp.eq.s32.totalorder %s27, 3
      %p129 = scmp.ne.s32.totalorder %s124, %s126
      %p130 = scmp.eq.s32.totalorder %s27, 0
      %p131 = por %p129, %p130
      %p132 = scmp.ne.s32.totalorder %s124, %s126
      %p133 = scmp.eq.s32.totalorder %s32, 3
      %p134 = por %p132, %p133
      %p135 = scmp.ne.s32.totalorder %s126, %s127
      %p136 = scmp.eq.s32.totalorder %s32, 0
      %p137 = por %p135, %p136
      %p138 = scmp.ne.s32.totalorder %s126, %s127
      %p139 = scmp.eq.s32.totalorder %s33, 3
      %p140 = por %p138, %p139
      %p142 = scmp.ne.s32.totalorder %s127, %s141
      %p143 = scmp.eq.s32.totalorder %s33, 0
      %p144 = por %p142, %p143
      %s146 = sadd.s32 %s145, 1
      %p149 = scmp.eq.s32.totalorder %s27, 3
      %p150 = scmp.ne.s32.totalorder %s145, %s147
      %p151 = scmp.eq.s32.totalorder %s27, 0
      %p152 = por %p150, %p151
      %p153 = scmp.ne.s32.totalorder %s145, %s147
      %p154 = scmp.eq.s32.totalorder %s32, 3
      %p155 = por %p153, %p154
      %p156 = scmp.ne.s32.totalorder %s147, %s148
      %p157 = scmp.eq.s32.totalorder %s32, 0
      %p158 = por %p156, %p157
      %p159 = scmp.ne.s32.totalorder %s147, %s148
      %p160 = scmp.eq.s32.totalorder %s33, 3
      %p161 = por %p159, %p160
      %p163 = scmp.ne.s32.totalorder %s148, %s162
      %p164 = scmp.eq.s32.totalorder %s33, 0
      %p165 = por %p163, %p164
      %s167 = sadd.s32 %s166, 1
      %p170 = scmp.eq.s32.totalorder %s27, 3
      %p171 = scmp.ne.s32.totalorder %s166, %s168
      %p172 = scmp.eq.s32.totalorder %s27, 0
      %p173 = por %p171, %p172
      %p174 = scmp.ne.s32.totalorder %s166, %s168
      %p175 = scmp.eq.s32.totalorder %s32, 3
      %p176 = por %p174, %p175
      %p177 = scmp.ne.s32.totalorder %s168, %s169
      %p178 = scmp.eq.s32.totalorder %s32, 0
      %p179 = por %p177, %p178
      %p180 = scmp.ne.s32.totalorder %s168, %s169
      %p181 = scmp.eq.s32.totalorder %s33, 3
      %p182 = por %p180, %p181
      %p184 = scmp.ne.s32.totalorder %s169, %s183
      %p185 = scmp.eq.s32.totalorder %s33, 0
      %p186 = por %p184, %p185
      %s188 = sadd.s32 %s187, 1
      %p191 = scmp.eq.s32.totalorder %s27, 3
      %p192 = scmp.ne.s32.totalorder %s187, %s189
      %p193 = scmp.eq.s32.totalorder %s27, 0
      %p194 = por %p192, %p193
      %p195 = scmp.ne.s32.totalorder %s187, %s189
      %p196 = scmp.eq.s32.totalorder %s32, 3
      %p197 = por %p195, %p196
      %p198 = scmp.ne.s32.totalorder %s189, %s190
      %p199 = scmp.eq.s32.totalorder %s32, 0
      %p200 = por %p198, %p199
      %p201 = scmp.ne.s32.totalorder %s189, %s190
      %p202 = scmp.eq.s32.totalorder %s33, 3
      %p203 = por %p201, %p202
      %p205 = scmp.ne.s32.totalorder %s190, %s204
      %p206 = scmp.eq.s32.totalorder %s33, 0
      %p207 = por %p205, %p206
      %s209 = sadd.s32 %s208, 1
      %p212 = scmp.eq.s32.totalorder %s27, 3
      %p213 = scmp.ne.s32.totalorder %s208, %s210
      %p214 = scmp.eq.s32.totalorder %s27, 0
      %p215 = por %p213, %p214
      %p216 = scmp.ne.s32.totalorder %s208, %s210
      %p217 = scmp.eq.s32.totalorder %s32, 3
      %p218 = por %p216, %p217
      %p219 = scmp.ne.s32.totalorder %s210, %s211
      %p220 = scmp.eq.s32.totalorder %s32, 0
      %p221 = por %p219, %p220
      %p222 = scmp.ne.s32.totalorder %s210, %s211
      %p223 = scmp.eq.s32.totalorder %s33, 3
      %p224 = por %p222, %p223
      %p226 = scmp.ne.s32.totalorder %s211, %s225
      %p227 = scmp.eq.s32.totalorder %s33, 0
      %p228 = por %p226, %p227
      %p229 = scmp.le.s32.totalorder 1, %s27
      %p230 = scmp.lt.s32.totalorder %s27, 5
      %p231 = pnand %p229, %p230
      %p232 = pneg %p231
      // Predicated region
      $region9: #{cgconv_block.1} parent=5 // pred_check
        _
      $region10: #{cgconv_block.1} parent=5 // pred_check_branch
        %234 = sbr.rel (%p231) target = $region12
      $region11: #{cgconv_block.1} parent=5 // pred_region
        %s235 = ssub.s32 %s27, 1
        // Predicated region
        $region13: #{cgconv_block.1} parent=11 // pred_check
          %p236 = pneg %p48
        $region14: #{cgconv_block.1} parent=11 // pred_check_branch
          %238 = sbr.rel (%p236) target = $region16
        $region15: #{cgconv_block.1} parent=11 // pred_region
          _
        $region16: #{cgconv_block.1} parent=11 // pred_fallthru
          _
        // Predicated region
        $region17: #{cgconv_block.1} parent=11 // pred_check
          %p239 = pneg %p95
        $region18: #{cgconv_block.1} parent=11 // pred_check_branch
          %241 = sbr.rel (%p239) target = $region20
        $region19: #{cgconv_block.1} parent=11 // pred_region
          _
        $region20: #{cgconv_block.1} parent=11 // pred_fallthru
          _
        // Predicated region
        $region21: #{cgconv_block.1} parent=11 // pred_check
          %p242 = pneg %p116
        $region22: #{cgconv_block.1} parent=11 // pred_check_branch
          %244 = sbr.rel (%p242) target = $region24
        $region23: #{cgconv_block.1} parent=11 // pred_region
          _
        $region24: #{cgconv_block.1} parent=11 // pred_fallthru
          _
        // Predicated region
        $region25: #{cgconv_block.1} parent=11 // pred_check
          %p245 = pneg %p137
        $region26: #{cgconv_block.1} parent=11 // pred_check_branch
          %247 = sbr.rel (%p245) target = $region28
        $region27: #{cgconv_block.1} parent=11 // pred_region
          _
        $region28: #{cgconv_block.1} parent=11 // pred_fallthru
          _
        // Predicated region
        $region29: #{cgconv_block.1} parent=11 // pred_check
          %p248 = pneg %p158
        $region30: #{cgconv_block.1} parent=11 // pred_check_branch
          %250 = sbr.rel (%p248) target = $region32
        $region31: #{cgconv_block.1} parent=11 // pred_region
          _
        $region32: #{cgconv_block.1} parent=11 // pred_fallthru
          _
        // Predicated region
        $region33: #{cgconv_block.1} parent=11 // pred_check
          %p251 = pneg %p179
        $region34: #{cgconv_block.1} parent=11 // pred_check_branch
          %253 = sbr.rel (%p251) target = $region36
        $region35: #{cgconv_block.1} parent=11 // pred_region
          _
        $region36: #{cgconv_block.1} parent=11 // pred_fallthru
          _
        // Predicated region
        $region37: #{cgconv_block.1} parent=11 // pred_check
          %p254 = pneg %p200
        $region38: #{cgconv_block.1} parent=11 // pred_check_branch
          %256 = sbr.rel (%p254) target = $region40
        $region39: #{cgconv_block.1} parent=11 // pred_region
          _
        $region40: #{cgconv_block.1} parent=11 // pred_fallthru
          _
      $region12: #{cgconv_block.1} parent=5 // pred_fallthru
        _
      %p257 = scmp.lt.s32.totalorder %s27, 4
      // Predicated region
      $region41: #{cgconv_block.1} parent=5 // pred_check
        %p258 = pneg %p257
      $region42: #{cgconv_block.1} parent=5 // pred_check_branch
        %260 = sbr.rel (%p258) target = $region44
      $region43: #{cgconv_block.1} parent=5 // pred_region
        // Predicated region
        $region45: #{cgconv_block.1} parent=43 // pred_check
          %p261 = pneg %p68
        $region46: #{cgconv_block.1} parent=43 // pred_check_branch
          %263 = sbr.rel (%p261) target = $region48
        $region47: #{cgconv_block.1} parent=43 // pred_region
          %s264 = smul.u32 16, %s27
          %p265 = scmp.lt.s32.totalorder %s264, 63
          %s266 = scalar_select %p265, %s264, 63
          %s267 = smul.addr %s266, 8
          %s268 = scalar_lea.vmem %s3, %s267
          %s269 = smul.u32 16, %s27
        $region48: #{cgconv_block.1} parent=43 // pred_fallthru
          _
      $region44: #{cgconv_block.1} parent=5 // pred_fallthru
        _
      %p270 = scmp.le.s32.totalorder 1, %s27
      %p271 = scmp.lt.s32.totalorder %s27, 5
      %p272 = pnand %p270, %p271
      %p273 = pneg %p272
      // Predicated region
      $region49: #{cgconv_block.1} parent=5 // pred_check
        _
      $region50: #{cgconv_block.1} parent=5 // pred_check_branch
        %275 = sbr.rel (%p272) target = $region52
      $region51: #{cgconv_block.1} parent=5 // pred_region
        %s276 = ssub.s32 %s27, 1
        %p277 = pneg %p48
        %p278 = pneg %p45
        %s279 = smul.u32 16, %s32
        %p280 = scmp.lt.s32.totalorder %s279, 63
        %s281 = scalar_select %p280, %s279, 63
        %s282 = smul.addr %s281, 8
        %s283 = scalar_lea.vmem %s3, %s282
        %p284 = pneg %p74
        %p285 = pneg %p71
        %p286 = pneg %p95
        %p287 = pneg %p92
        %p288 = pneg %p116
        %p289 = pneg %p113
        %p290 = pneg %p137
        %p291 = pneg %p134
        %p292 = pneg %p158
        %p293 = pneg %p155
        %p294 = pneg %p179
        %p295 = pneg %p176
        %p296 = pneg %p200
        %p297 = pneg %p197
        %p298 = pneg %p221
        %p299 = pneg %p218
        %s300 = smul.u32 16, %s32
        %p301 = scmp.lt.s32.totalorder %s300, 63
        %s302 = scalar_select %p301, %s300, 63
        %s303 = smul.addr %s302, 8
        %s304 = scalar_lea.vmem %s3, %s303
        %s305 = smul.u32 16, %s32
        %s306 = smul.u32 %s32, 128
        %p307 = scmp.eq.s32.totalorder %s32, 0
        // Predicated region
        $region53: #{cgconv_block.1} parent=51 // pred_check
          %p308 = pneg %p307
        $region54: #{cgconv_block.1} parent=51 // pred_check_branch
          %310 = sbr.rel (%p308) target = $region56
        $region55: #{cgconv_block.1} parent=51 // pred_region
          %311 = vst [vmem:[#allocation2] sm:$0xff] 0.0
          %312 = vst [vmem:[#allocation2 + $0x8] sm:$0xff] 0.0
          %313 = vst [vmem:[#allocation2 + $0x10] sm:$0xff] 0.0
          %314 = vst [vmem:[#allocation2 + $0x18] sm:$0xff] 0.0
          %315 = vst [vmem:[#allocation2 + $0x20] sm:$0xff] 0.0
          %316 = vst [vmem:[#allocation2 + $0x28] sm:$0xff] 0.0
          %317 = vst [vmem:[#allocation2 + $0x30] sm:$0xff] 0.0
          %318 = vst [vmem:[#allocation2 + $0x38] sm:$0xff] 0.0
          %319 = vst [vmem:[#allocation2 + $0x40] sm:$0xff] 0.0
          %320 = vst [vmem:[#allocation2 + $0x48] sm:$0xff] 0.0
          %321 = vst [vmem:[#allocation2 + $0x50] sm:$0xff] 0.0
          %322 = vst [vmem:[#allocation2 + $0x58] sm:$0xff] 0.0
          %323 = vst [vmem:[#allocation2 + $0x60] sm:$0xff] 0.0
          %324 = vst [vmem:[#allocation2 + $0x68] sm:$0xff] 0.0
          %325 = vst [vmem:[#allocation2 + $0x70] sm:$0xff] 0.0
          %326 = vst [vmem:[#allocation2 + $0x78] sm:$0xff] 0.0
          %327 = vst [vmem:[#allocation2 + $0x80] sm:$0xff] 0.0
        $region56: #{cgconv_block.1} parent=51 // pred_fallthru
          _
        loop: start=0, step=1, limit=128
        $region57: #{cgconv_block.1} parent=51 // loop_pre_header
          _
        $region58: #{cgconv_block.1} parent=51 // loop_header
          %s329 = sphi 0, %s333
          %p330 = scmp.ge.s32.totalorder %s329, 128
        $region59: #{cgconv_block.1} parent=51 // loop_header_branch
          %332 = sbr.rel (%p330) target = $region63
        $region60: #{cgconv_block.1} parent=51 // loop_body
          %s334 = sadd.s32 %s306, %s329
          %s335 = sld [smem:[#allocation7 + %s334]]
          %s336 = sld [smem:[#allocation8 + %s334]]
          %s337 = scalar_lea.vmem %s2, %s335
          %v338 = vld [vmem:[%s337] sm:$0x1]
          %s339 = scalar_lea.vmem [#allocation4], %s329
          %340 = vst [vmem:[%s339] sm:$0x1] %v338
          %s341 = scalar_lea.vmem %s2, %s336
          %v342 = vld [vmem:[%s341] sm:$0x1]
          %s343 = scalar_lea.vmem [#allocation3], %s329
          %344 = vst [vmem:[%s343] sm:$0x1] %v342
        $region61: #{cgconv_block.1} parent=51 // loop_footer
          %s333 = sadd.s32 1, %s329
        $region62: #{cgconv_block.1} parent=51 // loop_footer_branch
          %328 = sbr.rel target = $region58
        $region63: #{cgconv_block.1} parent=51 // loop_exit
          _
        %v345 = vld [vmem:[#allocation3] sm:$0xff]
        %v346 = vld [vmem:[#allocation3 + $0x8] sm:$0xff]
        %v347 = vld [vmem:[#allocation3 + $0x10] sm:$0xff]
        %v348 = vld [vmem:[#allocation3 + $0x18] sm:$0xff]
        %v349 = vld [vmem:[#allocation3 + $0x20] sm:$0xff]
        %v350 = vld [vmem:[#allocation3 + $0x28] sm:$0xff]
        %v351 = vld [vmem:[#allocation3 + $0x30] sm:$0xff]
        %v352 = vld [vmem:[#allocation3 + $0x38] sm:$0xff]
        %v353 = vld [vmem:[#allocation3 + $0x40] sm:$0xff]
        %v354 = vld [vmem:[#allocation3 + $0x48] sm:$0xff]
        %v355 = vld [vmem:[#allocation3 + $0x50] sm:$0xff]
        %v356 = vld [vmem:[#allocation3 + $0x58] sm:$0xff]
        %v357 = vld [vmem:[#allocation3 + $0x60] sm:$0xff]
        %v358 = vld [vmem:[#allocation3 + $0x68] sm:$0xff]
        %v359 = vld [vmem:[#allocation3 + $0x70] sm:$0xff]
        %v360 = vld [vmem:[#allocation3 + $0x78] sm:$0xff]
        %v361 = vld [vmem:[#allocation4] sm:$0xff]
        %v362 = vld [vmem:[#allocation4 + $0x8] sm:$0xff]
        %v363 = vld [vmem:[#allocation4 + $0x10] sm:$0xff]
        %v364 = vld [vmem:[#allocation4 + $0x18] sm:$0xff]
        %v365 = vld [vmem:[#allocation4 + $0x20] sm:$0xff]
        %v366 = vld [vmem:[#allocation4 + $0x28] sm:$0xff]
        %v367 = vld [vmem:[#allocation4 + $0x30] sm:$0xff]
        %v368 = vld [vmem:[#allocation4 + $0x38] sm:$0xff]
        %v369 = vld [vmem:[#allocation4 + $0x40] sm:$0xff]
        %v370 = vld [vmem:[#allocation4 + $0x48] sm:$0xff]
        %v371 = vld [vmem:[#allocation4 + $0x50] sm:$0xff]
        %v372 = vld [vmem:[#allocation4 + $0x58] sm:$0xff]
        %v373 = vld [vmem:[#allocation4 + $0x60] sm:$0xff]
        %v374 = vld [vmem:[#allocation4 + $0x68] sm:$0xff]
        %v375 = vld [vmem:[#allocation4 + $0x70] sm:$0xff]
        %v376 = vld [vmem:[#allocation4 + $0x78] sm:$0xff]
        %v377 = vld [vmem:[%s304] sm:$0xff]
        %v378 = vld [vmem:[%s304 + $0x8] sm:$0xff]
        %v379 = vld [vmem:[%s304 + $0x10] sm:$0xff]
        %v380 = vld [vmem:[%s304 + $0x18] sm:$0xff]
        %v381 = vld [vmem:[%s304 + $0x20] sm:$0xff]
        %v382 = vld [vmem:[%s304 + $0x28] sm:$0xff]
        %v383 = vld [vmem:[%s304 + $0x30] sm:$0xff]
        %v384 = vld [vmem:[%s304 + $0x38] sm:$0xff]
        %v385 = vld [vmem:[%s304 + $0x40] sm:$0xff]
        %v386 = vld [vmem:[%s304 + $0x48] sm:$0xff]
        %v387 = vld [vmem:[%s304 + $0x50] sm:$0xff]
        %v388 = vld [vmem:[%s304 + $0x58] sm:$0xff]
        %v389 = vld [vmem:[%s304 + $0x60] sm:$0xff]
        %v390 = vld [vmem:[%s304 + $0x68] sm:$0xff]
        %v391 = vld [vmem:[%s304 + $0x70] sm:$0xff]
        %v392 = vld [vmem:[%s304 + $0x78] sm:$0xff]
        %v393 = vld [vmem:[%s4] sm:$0xff]
        %v394 = vld [vmem:[%s4 + $0x8] sm:$0xff]
        %v395 = vld [vmem:[%s4 + $0x10] sm:$0xff]
        %v396 = vld [vmem:[%s4 + $0x18] sm:$0xff]
        %v397 = vld [vmem:[%s4 + $0x20] sm:$0xff]
        %v398 = vld [vmem:[%s4 + $0x28] sm:$0xff]
        %v399 = vld [vmem:[%s4 + $0x30] sm:$0xff]
        %v400 = vld [vmem:[%s4 + $0x38] sm:$0xff]
        %v401 = vld [vmem:[%s4 + $0x40] sm:$0xff]
        %v402 = vld [vmem:[%s4 + $0x48] sm:$0xff]
        %v403 = vld [vmem:[%s4 + $0x50] sm:$0xff]
        %v404 = vld [vmem:[%s4 + $0x58] sm:$0xff]
        %v405 = vld [vmem:[%s4 + $0x60] sm:$0xff]
        %v406 = vld [vmem:[%s4 + $0x68] sm:$0xff]
        %v407 = vld [vmem:[%s4 + $0x70] sm:$0xff]
        %v408 = vld [vmem:[%s4 + $0x78] sm:$0xff]
        %v409 = vld [vmem:[%s4 + $0x80] sm:$0xff]
        %v410 = vld [vmem:[%s4 + $0x88] sm:$0xff]
        %v411 = vld [vmem:[%s4 + $0x90] sm:$0xff]
        %v412 = vld [vmem:[%s4 + $0x98] sm:$0xff]
        %v413 = vld [vmem:[%s4 + $0xa0] sm:$0xff]
        %v414 = vld [vmem:[%s4 + $0xa8] sm:$0xff]
        %v415 = vld [vmem:[%s4 + $0xb0] sm:$0xff]
        %v416 = vld [vmem:[%s4 + $0xb8] sm:$0xff]
        %v417 = vld [vmem:[%s4 + $0xc0] sm:$0xff]
        %v418 = vld [vmem:[%s4 + $0xc8] sm:$0xff]
        %v419 = vld [vmem:[%s4 + $0xd0] sm:$0xff]
        %v420 = vld [vmem:[%s4 + $0xd8] sm:$0xff]
        %v421 = vld [vmem:[%s4 + $0xe0] sm:$0xff]
        %v422 = vld [vmem:[%s4 + $0xe8] sm:$0xff]
        %v423 = vld [vmem:[%s4 + $0xf0] sm:$0xff]
        %v424 = vld [vmem:[%s4 + $0xf8] sm:$0xff]
        %v425 = vld [vmem:[%s5] sm:$0xff]
        %v426 = vld [vmem:[%s5 + $0x8] sm:$0xff]
        %v427 = vld [vmem:[%s5 + $0x10] sm:$0xff]
        %v428 = vld [vmem:[%s5 + $0x18] sm:$0xff]
        %v429 = vld [vmem:[%s5 + $0x20] sm:$0xff]
        %v430 = vld [vmem:[%s5 + $0x28] sm:$0xff]
        %v431 = vld [vmem:[%s5 + $0x30] sm:$0xff]
        %v432 = vld [vmem:[%s5 + $0x38] sm:$0xff]
        %v433 = vld [vmem:[%s5 + $0x40] sm:$0xff]
        %v434 = vld [vmem:[%s5 + $0x48] sm:$0xff]
        %v435 = vld [vmem:[%s5 + $0x50] sm:$0xff]
        %v436 = vld [vmem:[%s5 + $0x58] sm:$0xff]
        %v437 = vld [vmem:[%s5 + $0x60] sm:$0xff]
        %v438 = vld [vmem:[%s5 + $0x68] sm:$0xff]
        %v439 = vld [vmem:[%s5 + $0x70] sm:$0xff]
        %v440 = vld [vmem:[%s5 + $0x78] sm:$0xff]
        %v441 = vld [vmem:[%s5 + $0x80] sm:$0xff]
        %v442 = vld [vmem:[%s5 + $0x88] sm:$0xff]
        %v443 = vld [vmem:[%s5 + $0x90] sm:$0xff]
        %v444 = vld [vmem:[%s5 + $0x98] sm:$0xff]
        %v445 = vld [vmem:[%s5 + $0xa0] sm:$0xff]
        %v446 = vld [vmem:[%s5 + $0xa8] sm:$0xff]
        %v447 = vld [vmem:[%s5 + $0xb0] sm:$0xff]
        %v448 = vld [vmem:[%s5 + $0xb8] sm:$0xff]
        %v449 = vld [vmem:[%s5 + $0xc0] sm:$0xff]
        %v450 = vld [vmem:[%s5 + $0xc8] sm:$0xff]
        %v451 = vld [vmem:[%s5 + $0xd0] sm:$0xff]
        %v452 = vld [vmem:[%s5 + $0xd8] sm:$0xff]
        %v453 = vld [vmem:[%s5 + $0xe0] sm:$0xff]
        %v454 = vld [vmem:[%s5 + $0xe8] sm:$0xff]
        %v455 = vld [vmem:[%s5 + $0xf0] sm:$0xff]
        %v456 = vld [vmem:[%s5 + $0xf8] sm:$0xff]
        %457 = vmatprep.subr.mxu0 %v426
        %458 = vmatpush1.msra.mxu0 %v425
        %459 = vmatprep.subr.mxu0 %v428
        %460 = vmatpush1.msra.mxu0 %v427
        %461 = vmatprep.subr.mxu0 %v430
        %462 = vmatpush1.msra.mxu0 %v429
        %463 = vmatprep.subr.mxu0 %v432
        %464 = vmatpush1.msra.mxu0 %v431
        %465 = vmatprep.subr.mxu0 %v434
        %466 = vmatpush1.msra.mxu0 %v433
        %467 = vmatprep.subr.mxu0 %v436
        %468 = vmatpush1.msra.mxu0 %v435
        %469 = vmatprep.subr.mxu0 %v438
        %470 = vmatpush1.msra.mxu0 %v437
        %471 = vmatprep.subr.mxu0 %v440
        %472 = vmatpush1.msra.mxu0 %v439
        %473 = vmatprep.subr.mxu0 %v442
        %474 = vmatpush1.msra.mxu0 %v441
        %475 = vmatprep.subr.mxu0 %v444
        %476 = vmatpush1.msra.mxu0 %v443
        %477 = vmatprep.subr.mxu0 %v446
        %478 = vmatpush1.msra.mxu0 %v445
        %479 = vmatprep.subr.mxu0 %v448
        %480 = vmatpush1.msra.mxu0 %v447
        %481 = vmatprep.subr.mxu0 %v450
        %482 = vmatpush1.msra.mxu0 %v449
        %483 = vmatprep.subr.mxu0 %v452
        %484 = vmatpush1.msra.mxu0 %v451
        %485 = vmatprep.subr.mxu0 %v454
        %486 = vmatpush1.msra.mxu0 %v453
        %487 = vmatprep.subr.mxu0 %v456
        %488 = vmatpush1.msra.mxu0 %v455
        %489 = vmatprep.subr.mxu0 0.0
        %490 = vmatpush1.msra.mxu0 0.0
        %491 = vmatprep.subr.mxu0 0.0
        %492 = vmatpush1.msra.mxu0 0.0
        %493 = vmatprep.subr.mxu0 0.0
        %494 = vmatpush1.msra.mxu0 0.0
        %495 = vmatprep.subr.mxu0 0.0
        %496 = vmatpush1.msra.mxu0 0.0
        %497 = vmatprep.subr.mxu0 0.0
        %498 = vmatpush1.msra.mxu0 0.0
        %499 = vmatprep.subr.mxu0 0.0
        %500 = vmatpush1.msra.mxu0 0.0
        %501 = vmatprep.subr.mxu0 0.0
        %502 = vmatpush1.msra.mxu0 0.0
        %503 = vmatprep.subr.mxu0 0.0
        %504 = vmatpush1.msra.mxu0 0.0
        %505 = vmatprep.subr.mxu0 0.0
        %506 = vmatpush1.msra.mxu0 0.0
        %507 = vmatprep.subr.mxu0 0.0
        %508 = vmatpush1.msra.mxu0 0.0
        %509 = vmatprep.subr.mxu0 0.0
        %510 = vmatpush1.msra.mxu0 0.0
        %511 = vmatprep.subr.mxu0 0.0
        %512 = vmatpush1.msra.mxu0 0.0
        %513 = vmatprep.subr.mxu0 0.0
        %514 = vmatpush1.msra.mxu0 0.0
        %515 = vmatprep.subr.mxu0 0.0
        %516 = vmatpush1.msra.mxu0 0.0
        %517 = vmatprep.subr.mxu0 0.0
        %518 = vmatpush1.msra.mxu0 0.0
        %519 = vmatprep.subr.mxu0 0.0
        %520 = vmatpush1.msra.mxu0 0.0
        %521 = vmatprep.mubr.f32.mxu0 0.0
        %522 = vmatmul.mubr.f32.gmra.mrb[0].mxu0 %v361
        %v523 = vpop.f32.mrb[0].mxu0
        %v524 = vadd.f32 0.0, %v523
        %v525 = vpop.f32.mrb[0].mxu0
        %v526 = vadd.f32 0.0, %v525
        %527 = vmatprep.mubr.f32.mxu0 0.0
        %528 = vmatmul.mubr.f32.gmra.mrb[0].mxu0 %v362
        %v529 = vpop.f32.mrb[0].mxu0
        %v530 = vadd.f32 0.0, %v529
        %v531 = vpop.f32.mrb[0].mxu0
        %v532 = vadd.f32 0.0, %v531
        %533 = vmatprep.mubr.f32.mxu0 0.0
        %534 = vmatmul.mubr.f32.gmra.mrb[0].mxu0 %v363
        %v535 = vpop.f32.mrb[0].mxu0
        %v536 = vadd.f32 0.0, %v535
        %v537 = vpop.f32.mrb[0].mxu0
        %v538 = vadd.f32 0.0, %v537
        %539 = vmatprep.mubr.f32.mxu0 0.0
        %540 = vmatmul.mubr.f32.gmra.mrb[0].mxu0 %v364
        %v541 = vpop.f32.mrb[0].mxu0
        %v542 = vadd.f32 0.0, %v541
        %v543 = vpop.f32.mrb[0].mxu0
        %v544 = vadd.f32 0.0, %v543
        %545 = vmatprep.mubr.f32.mxu0 0.0
        %546 = vmatmul.mubr.f32.gmra.mrb[0].mxu0 %v365
        %v547 = vpop.f32.mrb[0].mxu0
        %v548 = vadd.f32 0.0, %v547
        %v549 = vpop.f32.mrb[0].mxu0
        %v550 = vadd.f32 0.0, %v549
        %551 = vmatprep.mubr.f32.mxu0 0.0
        %552 = vmatmul.mubr.f32.gmra.mrb[0].mxu0 %v366
        %v553 = vpop.f32.mrb[0].mxu0
        %v554 = vadd.f32 0.0, %v553
        %v555 = vpop.f32.mrb[0].mxu0
        %v556 = vadd.f32 0.0, %v555
        %557 = vmatprep.mubr.f32.mxu0 0.0
        %558 = vmatmul.mubr.f32.gmra.mrb[0].mxu0 %v367
        %v559 = vpop.f32.mrb[0].mxu0
        %v560 = vadd.f32 0.0, %v559
        %v561 = vpop.f32.mrb[0].mxu0
        %v562 = vadd.f32 0.0, %v561
        %563 = vmatprep.mubr.f32.mxu0 0.0
        %564 = vmatmul.mubr.f32.gmra.mrb[0].mxu0 %v368
        %v565 = vpop.f32.mrb[0].mxu0
        %v566 = vadd.f32 0.0, %v565
        %v567 = vpop.f32.mrb[0].mxu0
        %v568 = vadd.f32 0.0, %v567
        %569 = vmatprep.mubr.f32.mxu0 0.0
        %570 = vmatmul.mubr.f32.gmra.mrb[0].mxu0 %v369
        %v571 = vpop.f32.mrb[0].mxu0
        %v572 = vadd.f32 0.0, %v571
        %v573 = vpop.f32.mrb[0].mxu0
        %v574 = vadd.f32 0.0, %v573
        %575 = vmatprep.mubr.f32.mxu0 0.0
        %576 = vmatmul.mubr.f32.gmra.mrb[0].mxu0 %v370
        %v577 = vpop.f32.mrb[0].mxu0
        %v578 = vadd.f32 0.0, %v577
        %v579 = vpop.f32.mrb[0].mxu0
        %v580 = vadd.f32 0.0, %v579
        %581 = vmatprep.mubr.f32.mxu0 0.0
        %582 = vmatmul.mubr.f32.gmra.mrb[0].mxu0 %v371
        %v583 = vpop.f32.mrb[0].mxu0
        %v584 = vadd.f32 0.0, %v583
        %v585 = vpop.f32.mrb[0].mxu0
        %v586 = vadd.f32 0.0, %v585
        %587 = vmatprep.mubr.f32.mxu0 0.0
        %588 = vmatmul.mubr.f32.gmra.mrb[0].mxu0 %v372
        %v589 = vpop.f32.mrb[0].mxu0
        %v590 = vadd.f32 0.0, %v589
        %v591 = vpop.f32.mrb[0].mxu0
        %v592 = vadd.f32 0.0, %v591
        %593 = vmatprep.mubr.f32.mxu0 0.0
        %594 = vmatmul.mubr.f32.gmra.mrb[0].mxu0 %v373
        %v595 = vpop.f32.mrb[0].mxu0
        %v596 = vadd.f32 0.0, %v595
        %v597 = vpop.f32.mrb[0].mxu0
        %v598 = vadd.f32 0.0, %v597
        %599 = vmatprep.mubr.f32.mxu0 0.0
        %600 = vmatmul.mubr.f32.gmra.mrb[0].mxu0 %v374
        %v601 = vpop.f32.mrb[0].mxu0
        %v602 = vadd.f32 0.0, %v601
        %v603 = vpop.f32.mrb[0].mxu0
        %v604 = vadd.f32 0.0, %v603
        %605 = vmatprep.mubr.f32.mxu0 0.0
        %606 = vmatmul.mubr.f32.gmra.mrb[0].mxu0 %v375
        %v607 = vpop.f32.mrb[0].mxu0
        %v608 = vadd.f32 0.0, %v607
        %v609 = vpop.f32.mrb[0].mxu0
        %v610 = vadd.f32 0.0, %v609
        %611 = vmatprep.mubr.f32.mxu0 0.0
        %612 = vmatmul.mubr.f32.gmra.mrb[0].mxu0 %v376
        %v613 = vpop.f32.mrb[0].mxu0
        %v614 = vadd.f32 0.0, %v613
        %v615 = vpop.f32.mrb[0].mxu0
        %v616 = vadd.f32 0.0, %v615
        %617 = vdwg.mxu0
        %618 = vmatprep.subr.mxu0 %v394
        %619 = vmatpush1.msra.mxu0 %v393
        %620 = vmatprep.subr.mxu0 %v396
        %621 = vmatpush1.msra.mxu0 %v395
        %622 = vmatprep.subr.mxu0 %v398
        %623 = vmatpush1.msra.mxu0 %v397
        %624 = vmatprep.subr.mxu0 %v400
        %625 = vmatpush1.msra.mxu0 %v399
        %626 = vmatprep.subr.mxu0 %v402
        %627 = vmatpush1.msra.mxu0 %v401
        %628 = vmatprep.subr.mxu0 %v404
        %629 = vmatpush1.msra.mxu0 %v403
        %630 = vmatprep.subr.mxu0 %v406
        %631 = vmatpush1.msra.mxu0 %v405
        %632 = vmatprep.subr.mxu0 %v408
        %633 = vmatpush1.msra.mxu0 %v407
        %634 = vmatprep.subr.mxu0 %v410
        %635 = vmatpush1.msra.mxu0 %v409
        %636 = vmatprep.subr.mxu0 %v412
        %637 = vmatpush1.msra.mxu0 %v411
        %638 = vmatprep.subr.mxu0 %v414
        %639 = vmatpush1.msra.mxu0 %v413
        %640 = vmatprep.subr.mxu0 %v416
        %641 = vmatpush1.msra.mxu0 %v415
        %642 = vmatprep.subr.mxu0 %v418
        %643 = vmatpush1.msra.mxu0 %v417
        %644 = vmatprep.subr.mxu0 %v420
        %645 = vmatpush1.msra.mxu0 %v419
        %646 = vmatprep.subr.mxu0 %v422
        %647 = vmatpush1.msra.mxu0 %v421
        %648 = vmatprep.subr.mxu0 %v424
        %649 = vmatpush1.msra.mxu0 %v423
        %650 = vmatprep.subr.mxu0 0.0
        %651 = vmatpush1.msra.mxu0 0.0
        %652 = vmatprep.subr.mxu0 0.0
        %653 = vmatpush1.msra.mxu0 0.0
        %654 = vmatprep.subr.mxu0 0.0
        %655 = vmatpush1.msra.mxu0 0.0
        %656 = vmatprep.subr.mxu0 0.0
        %657 = vmatpush1.msra.mxu0 0.0
        %658 = vmatprep.subr.mxu0 0.0
        %659 = vmatpush1.msra.mxu0 0.0
        %660 = vmatprep.subr.mxu0 0.0
        %661 = vmatpush1.msra.mxu0 0.0
        %662 = vmatprep.subr.mxu0 0.0
        %663 = vmatpush1.msra.mxu0 0.0
        %664 = vmatprep.subr.mxu0 0.0
        %665 = vmatpush1.msra.mxu0 0.0
        %666 = vmatprep.subr.mxu0 0.0
        %667 = vmatpush1.msra.mxu0 0.0
        %668 = vmatprep.subr.mxu0 0.0
        %669 = vmatpush1.msra.mxu0 0.0
        %670 = vmatprep.subr.mxu0 0.0
        %671 = vmatpush1.msra.mxu0 0.0
        %672 = vmatprep.subr.mxu0 0.0
        %673 = vmatpush1.msra.mxu0 0.0
        %674 = vmatprep.subr.mxu0 0.0
        %675 = vmatpush1.msra.mxu0 0.0
        %676 = vmatprep.subr.mxu0 0.0
        %677 = vmatpush1.msra.mxu0 0.0
        %678 = vmatprep.subr.mxu0 0.0
        %679 = vmatpush1.msra.mxu0 0.0
        %680 = vmatprep.subr.mxu0 0.0
        %681 = vmatpush1.msra.mxu0 0.0
        %682 = vmatprep.mubr.f32.mxu0 0.0
        %683 = vmatmul.mubr.f32.gmra.mrb[0].mxu0 %v345
        %v684 = vpop.f32.mrb[0].mxu0
        %v685 = vadd.f32 %v524, %v684
        %v686 = vpop.f32.mrb[0].mxu0
        %v687 = vadd.f32 %v526, %v686
        %688 = vmatprep.mubr.f32.mxu0 0.0
        %689 = vmatmul.mubr.f32.gmra.mrb[0].mxu0 %v346
        %v690 = vpop.f32.mrb[0].mxu0
        %v691 = vadd.f32 %v530, %v690
        %v692 = vpop.f32.mrb[0].mxu0
        %v693 = vadd.f32 %v532, %v692
        %694 = vmatprep.mubr.f32.mxu0 0.0
        %695 = vmatmul.mubr.f32.gmra.mrb[0].mxu0 %v347
        %v696 = vpop.f32.mrb[0].mxu0
        %v697 = vadd.f32 %v536, %v696
        %v698 = vpop.f32.mrb[0].mxu0
        %v699 = vadd.f32 %v538, %v698
        %700 = vmatprep.mubr.f32.mxu0 0.0
        %701 = vmatmul.mubr.f32.gmra.mrb[0].mxu0 %v348
        %v702 = vpop.f32.mrb[0].mxu0
        %v703 = vadd.f32 %v542, %v702
        %v704 = vpop.f32.mrb[0].mxu0
        %v705 = vadd.f32 %v544, %v704
        %706 = vmatprep.mubr.f32.mxu0 0.0
        %707 = vmatmul.mubr.f32.gmra.mrb[0].mxu0 %v349
        %v708 = vpop.f32.mrb[0].mxu0
        %v709 = vadd.f32 %v548, %v708
        %v710 = vpop.f32.mrb[0].mxu0
        %v711 = vadd.f32 %v550, %v710
        %712 = vmatprep.mubr.f32.mxu0 0.0
        %713 = vmatmul.mubr.f32.gmra.mrb[0].mxu0 %v350
        %v714 = vpop.f32.mrb[0].mxu0
        %v715 = vadd.f32 %v554, %v714
        %v716 = vpop.f32.mrb[0].mxu0
        %v717 = vadd.f32 %v556, %v716
        %718 = vmatprep.mubr.f32.mxu0 0.0
        %719 = vmatmul.mubr.f32.gmra.mrb[0].mxu0 %v351
        %v720 = vpop.f32.mrb[0].mxu0
        %v721 = vadd.f32 %v560, %v720
        %v722 = vpop.f32.mrb[0].mxu0
        %v723 = vadd.f32 %v562, %v722
        %724 = vmatprep.mubr.f32.mxu0 0.0
        %725 = vmatmul.mubr.f32.gmra.mrb[0].mxu0 %v352
        %v726 = vpop.f32.mrb[0].mxu0
        %v727 = vadd.f32 %v566, %v726
        %v728 = vpop.f32.mrb[0].mxu0
        %v729 = vadd.f32 %v568, %v728
        %730 = vmatprep.mubr.f32.mxu0 0.0
        %731 = vmatmul.mubr.f32.gmra.mrb[0].mxu0 %v353
        %v732 = vpop.f32.mrb[0].mxu0
        %v733 = vadd.f32 %v572, %v732
        %v734 = vpop.f32.mrb[0].mxu0
        %v735 = vadd.f32 %v574, %v734
        %736 = vmatprep.mubr.f32.mxu0 0.0
        %737 = vmatmul.mubr.f32.gmra.mrb[0].mxu0 %v354
        %v738 = vpop.f32.mrb[0].mxu0
        %v739 = vadd.f32 %v578, %v738
        %v740 = vpop.f32.mrb[0].mxu0
        %v741 = vadd.f32 %v580, %v740
        %742 = vmatprep.mubr.f32.mxu0 0.0
        %743 = vmatmul.mubr.f32.gmra.mrb[0].mxu0 %v355
        %v744 = vpop.f32.mrb[0].mxu0
        %v745 = vadd.f32 %v584, %v744
        %v746 = vpop.f32.mrb[0].mxu0
        %v747 = vadd.f32 %v586, %v746
        %748 = vmatprep.mubr.f32.mxu0 0.0
        %749 = vmatmul.mubr.f32.gmra.mrb[0].mxu0 %v356
        %v750 = vpop.f32.mrb[0].mxu0
        %v751 = vadd.f32 %v590, %v750
        %v752 = vpop.f32.mrb[0].mxu0
        %v753 = vadd.f32 %v592, %v752
        %754 = vmatprep.mubr.f32.mxu0 0.0
        %755 = vmatmul.mubr.f32.gmra.mrb[0].mxu0 %v357
        %v756 = vpop.f32.mrb[0].mxu0
        %v757 = vadd.f32 %v596, %v756
        %v758 = vpop.f32.mrb[0].mxu0
        %v759 = vadd.f32 %v598, %v758
        %760 = vmatprep.mubr.f32.mxu0 0.0
        %761 = vmatmul.mubr.f32.gmra.mrb[0].mxu0 %v358
        %v762 = vpop.f32.mrb[0].mxu0
        %v763 = vadd.f32 %v602, %v762
        %v764 = vpop.f32.mrb[0].mxu0
        %v765 = vadd.f32 %v604, %v764
        %766 = vmatprep.mubr.f32.mxu0 0.0
        %767 = vmatmul.mubr.f32.gmra.mrb[0].mxu0 %v359
        %v768 = vpop.f32.mrb[0].mxu0
        %v769 = vadd.f32 %v608, %v768
        %v770 = vpop.f32.mrb[0].mxu0
        %v771 = vadd.f32 %v610, %v770
        %772 = vmatprep.mubr.f32.mxu0 0.0
        %773 = vmatmul.mubr.f32.gmra.mrb[0].mxu0 %v360
        %v774 = vpop.f32.mrb[0].mxu0
        %v775 = vadd.f32 %v614, %v774
        %v776 = vpop.f32.mrb[0].mxu0
        %v777 = vadd.f32 %v616, %v776
        %778 = vdwg.mxu0
        %v779 = vld [vmem:[%s6] sm:$0xff]
        %v780 = vld [vmem:[%s6 + $0x8] sm:$0xff]
        %v781 = vld [vmem:[%s6 + $0x10] sm:$0xff]
        %v782 = vld [vmem:[%s6 + $0x18] sm:$0xff]
        %v783 = vld [vmem:[%s6 + $0x20] sm:$0xff]
        %v784 = vld [vmem:[%s6 + $0x28] sm:$0xff]
        %v785 = vld [vmem:[%s6 + $0x30] sm:$0xff]
        %v786 = vld [vmem:[%s6 + $0x38] sm:$0xff]
        %v787 = vld [vmem:[%s6 + $0x40] sm:$0xff]
        %v788 = vld [vmem:[%s6 + $0x48] sm:$0xff]
        %v789 = vld [vmem:[%s6 + $0x50] sm:$0xff]
        %v790 = vld [vmem:[%s6 + $0x58] sm:$0xff]
        %v791 = vld [vmem:[%s6 + $0x60] sm:$0xff]
        %v792 = vld [vmem:[%s6 + $0x68] sm:$0xff]
        %v793 = vld [vmem:[%s6 + $0x70] sm:$0xff]
        %v794 = vld [vmem:[%s6 + $0x78] sm:$0xff]
        %vm795 = vcmask 523264
        %v797 = vsel %vm795, %v377, 0
        %v800 = vsel %vm795, %v378, 0
        %v803 = vsel %vm795, %v379, 0
        %v806 = vsel %vm795, %v380, 0
        %v809 = vsel %vm795, %v381, 0
        %v812 = vsel %vm795, %v382, 0
        %v815 = vsel %vm795, %v383, 0
        %v818 = vsel %vm795, %v384, 0
        %v821 = vsel %vm795, %v385, 0
        %v824 = vsel %vm795, %v386, 0
        %v827 = vsel %vm795, %v387, 0
        %v830 = vsel %vm795, %v388, 0
        %v833 = vsel %vm795, %v389, 0
        %v836 = vsel %vm795, %v390, 0
        %v839 = vsel %vm795, %v391, 0
        %v842 = vsel %vm795, %v392, 0
        %844 = vmatprep.subr.mxu0 %v780
        %845 = vmatpush1.msra.mxu0 %v779
        %846 = vmatprep.subr.mxu0 %v782
        %847 = vmatpush1.msra.mxu0 %v781
        %848 = vmatprep.subr.mxu0 %v784
        %849 = vmatpush1.msra.mxu0 %v783
        %850 = vmatprep.subr.mxu0 %v786
        %851 = vmatpush1.msra.mxu0 %v785
        %852 = vmatprep.subr.mxu0 %v788
        %853 = vmatpush1.msra.mxu0 %v787
        %854 = vmatprep.subr.mxu0 %v790
        %855 = vmatpush1.msra.mxu0 %v789
        %856 = vmatprep.subr.mxu0 %v792
        %857 = vmatpush1.msra.mxu0 %v791
        %858 = vmatprep.subr.mxu0 %v794
        %859 = vmatpush1.msra.mxu0 %v793
        %860 = vmatprep.subr.mxu0 0.0
        %861 = vmatpush1.msra.mxu0 0.0
        %862 = vmatprep.subr.mxu0 0.0
        %863 = vmatpush1.msra.mxu0 0.0
        %864 = vmatprep.subr.mxu0 0.0
        %865 = vmatpush1.msra.mxu0 0.0
        %866 = vmatprep.subr.mxu0 0.0
        %867 = vmatpush1.msra.mxu0 0.0
        %868 = vmatprep.subr.mxu0 0.0
        %869 = vmatpush1.msra.mxu0 0.0
        %870 = vmatprep.subr.mxu0 0.0
        %871 = vmatpush1.msra.mxu0 0.0
        %872 = vmatprep.subr.mxu0 0.0
        %873 = vmatpush1.msra.mxu0 0.0
        %874 = vmatprep.subr.mxu0 0.0
        %875 = vmatpush1.msra.mxu0 0.0
        %876 = vmatprep.subr.mxu0 0.0
        %877 = vmatpush1.msra.mxu0 0.0
        %878 = vmatprep.subr.mxu0 0.0
        %879 = vmatpush1.msra.mxu0 0.0
        %880 = vmatprep.subr.mxu0 0.0
        %881 = vmatpush1.msra.mxu0 0.0
        %882 = vmatprep.subr.mxu0 0.0
        %883 = vmatpush1.msra.mxu0 0.0
        %884 = vmatprep.subr.mxu0 0.0
        %885 = vmatpush1.msra.mxu0 0.0
        %886 = vmatprep.subr.mxu0 0.0
        %887 = vmatpush1.msra.mxu0 0.0
        %888 = vmatprep.subr.mxu0 0.0
        %889 = vmatpush1.msra.mxu0 0.0
        %890 = vmatprep.subr.mxu0 0.0
        %891 = vmatpush1.msra.mxu0 0.0
        %892 = vmatprep.subr.mxu0 0.0
        %893 = vmatpush1.msra.mxu0 0.0
        %894 = vmatprep.subr.mxu0 0.0
        %895 = vmatpush1.msra.mxu0 0.0
        %896 = vmatprep.subr.mxu0 0.0
        %897 = vmatpush1.msra.mxu0 0.0
        %898 = vmatprep.subr.mxu0 0.0
        %899 = vmatpush1.msra.mxu0 0.0
        %900 = vmatprep.subr.mxu0 0.0
        %901 = vmatpush1.msra.mxu0 0.0
        %902 = vmatprep.subr.mxu0 0.0
        %903 = vmatpush1.msra.mxu0 0.0
        %904 = vmatprep.subr.mxu0 0.0
        %905 = vmatpush1.msra.mxu0 0.0
        %906 = vmatprep.subr.mxu0 0.0
        %907 = vmatpush1.msra.mxu0 0.0
        %908 = vmatprep.mubr.f32.mxu0 0.0
        %909 = vmatmul.mubr.f32.gmra.mrb[0].mxu0 %v797
        %v910 = vpop.f32.mrb[0].mxu0
        %v911 = vadd.f32 0.0, %v910
        %v912 = vpop.f32.mrb[0].mxu0
        %v913 = vadd.f32 0.0, %v912
        %914 = vmatprep.mubr.f32.mxu0 0.0
        %915 = vmatmul.mubr.f32.gmra.mrb[0].mxu0 %v800
        %v916 = vpop.f32.mrb[0].mxu0
        %v917 = vadd.f32 0.0, %v916
        %v918 = vpop.f32.mrb[0].mxu0
        %v919 = vadd.f32 0.0, %v918
        %920 = vmatprep.mubr.f32.mxu0 0.0
        %921 = vmatmul.mubr.f32.gmra.mrb[0].mxu0 %v803
        %v922 = vpop.f32.mrb[0].mxu0
        %v923 = vadd.f32 0.0, %v922
        %v924 = vpop.f32.mrb[0].mxu0
        %v925 = vadd.f32 0.0, %v924
        %926 = vmatprep.mubr.f32.mxu0 0.0
        %927 = vmatmul.mubr.f32.gmra.mrb[0].mxu0 %v806
        %v928 = vpop.f32.mrb[0].mxu0
        %v929 = vadd.f32 0.0, %v928
        %v930 = vpop.f32.mrb[0].mxu0
        %v931 = vadd.f32 0.0, %v930
        %932 = vmatprep.mubr.f32.mxu0 0.0
        %933 = vmatmul.mubr.f32.gmra.mrb[0].mxu0 %v809
        %v934 = vpop.f32.mrb[0].mxu0
        %v935 = vadd.f32 0.0, %v934
        %v936 = vpop.f32.mrb[0].mxu0
        %v937 = vadd.f32 0.0, %v936
        %938 = vmatprep.mubr.f32.mxu0 0.0
        %939 = vmatmul.mubr.f32.gmra.mrb[0].mxu0 %v812
        %v940 = vpop.f32.mrb[0].mxu0
        %v941 = vadd.f32 0.0, %v940
        %v942 = vpop.f32.mrb[0].mxu0
        %v943 = vadd.f32 0.0, %v942
        %944 = vmatprep.mubr.f32.mxu0 0.0
        %945 = vmatmul.mubr.f32.gmra.mrb[0].mxu0 %v815
        %v946 = vpop.f32.mrb[0].mxu0
        %v947 = vadd.f32 0.0, %v946
        %v948 = vpop.f32.mrb[0].mxu0
        %v949 = vadd.f32 0.0, %v948
        %950 = vmatprep.mubr.f32.mxu0 0.0
        %951 = vmatmul.mubr.f32.gmra.mrb[0].mxu0 %v818
        %v952 = vpop.f32.mrb[0].mxu0
        %v953 = vadd.f32 0.0, %v952
        %v954 = vpop.f32.mrb[0].mxu0
        %v955 = vadd.f32 0.0, %v954
        %956 = vmatprep.mubr.f32.mxu0 0.0
        %957 = vmatmul.mubr.f32.gmra.mrb[0].mxu0 %v821
        %v958 = vpop.f32.mrb[0].mxu0
        %v959 = vadd.f32 0.0, %v958
        %v960 = vpop.f32.mrb[0].mxu0
        %v961 = vadd.f32 0.0, %v960
        %962 = vmatprep.mubr.f32.mxu0 0.0
        %963 = vmatmul.mubr.f32.gmra.mrb[0].mxu0 %v824
        %v964 = vpop.f32.mrb[0].mxu0
        %v965 = vadd.f32 0.0, %v964
        %v966 = vpop.f32.mrb[0].mxu0
        %v967 = vadd.f32 0.0, %v966
        %968 = vmatprep.mubr.f32.mxu0 0.0
        %969 = vmatmul.mubr.f32.gmra.mrb[0].mxu0 %v827
        %v970 = vpop.f32.mrb[0].mxu0
        %v971 = vadd.f32 0.0, %v970
        %v972 = vpop.f32.mrb[0].mxu0
        %v973 = vadd.f32 0.0, %v972
        %974 = vmatprep.mubr.f32.mxu0 0.0
        %975 = vmatmul.mubr.f32.gmra.mrb[0].mxu0 %v830
        %v976 = vpop.f32.mrb[0].mxu0
        %v977 = vadd.f32 0.0, %v976
        %v978 = vpop.f32.mrb[0].mxu0
        %v979 = vadd.f32 0.0, %v978
        %980 = vmatprep.mubr.f32.mxu0 0.0
        %981 = vmatmul.mubr.f32.gmra.mrb[0].mxu0 %v833
        %v982 = vpop.f32.mrb[0].mxu0
        %v983 = vadd.f32 0.0, %v982
        %v984 = vpop.f32.mrb[0].mxu0
        %v985 = vadd.f32 0.0, %v984
        %986 = vmatprep.mubr.f32.mxu0 0.0
        %987 = vmatmul.mubr.f32.gmra.mrb[0].mxu0 %v836
        %v988 = vpop.f32.mrb[0].mxu0
        %v989 = vadd.f32 0.0, %v988
        %v990 = vpop.f32.mrb[0].mxu0
        %v991 = vadd.f32 0.0, %v990
        %992 = vmatprep.mubr.f32.mxu0 0.0
        %993 = vmatmul.mubr.f32.gmra.mrb[0].mxu0 %v839
        %v994 = vpop.f32.mrb[0].mxu0
        %v995 = vadd.f32 0.0, %v994
        %v996 = vpop.f32.mrb[0].mxu0
        %v997 = vadd.f32 0.0, %v996
        %998 = vmatprep.mubr.f32.mxu0 0.0
        %999 = vmatmul.mubr.f32.gmra.mrb[0].mxu0 %v842
        %v1000 = vpop.f32.mrb[0].mxu0
        %v1001 = vadd.f32 0.0, %v1000
        %v1002 = vpop.f32.mrb[0].mxu0
        %v1003 = vadd.f32 0.0, %v1002
        %1004 = vdwg.mxu0
        %v1005 = vadd.f32 %v685, %v911
        %v1006 = vadd.f32 %v687, %v913
        %v1007 = vadd.f32 %v691, %v917
        %v1008 = vadd.f32 %v693, %v919
        %v1009 = vadd.f32 %v697, %v923
        %v1010 = vadd.f32 %v699, %v925
        %v1011 = vadd.f32 %v703, %v929
        %v1012 = vadd.f32 %v705, %v931
        %v1013 = vadd.f32 %v709, %v935
        %v1014 = vadd.f32 %v711, %v937
        %v1015 = vadd.f32 %v715, %v941
        %v1016 = vadd.f32 %v717, %v943
        %v1017 = vadd.f32 %v721, %v947
        %v1018 = vadd.f32 %v723, %v949
        %v1019 = vadd.f32 %v727, %v953
        %v1020 = vadd.f32 %v729, %v955
        %v1021 = vadd.f32 %v733, %v959
        %v1022 = vadd.f32 %v735, %v961
        %v1023 = vadd.f32 %v739, %v965
        %v1024 = vadd.f32 %v741, %v967
        %v1025 = vadd.f32 %v745, %v971
        %v1026 = vadd.f32 %v747, %v973
        %v1027 = vadd.f32 %v751, %v977
        %v1028 = vadd.f32 %v753, %v979
        %v1029 = vadd.f32 %v757, %v983
        %v1030 = vadd.f32 %v759, %v985
        %v1031 = vadd.f32 %v763, %v989
        %v1032 = vadd.f32 %v765, %v991
        %v1033 = vadd.f32 %v769, %v995
        %v1034 = vadd.f32 %v771, %v997
        %v1035 = vadd.f32 %v775, %v1001
        %v1036 = vadd.f32 %v777, %v1003
        %v1037 = vld [vmem:[%s7] sm:$0x3]
        %v1039 = vlaneseq
        %v1040 = vshrl.u32 %v1039, 7
        %v1041 = vsub.s32 0, %v1040
        %v1042 = vrot.slane %v1037, %v1041
        %v1043 = vlaneseq
        %v1044 = vshrl.u32 %v1043, 7
        %v1045 = vsub.s32 1, %v1044
        %v1046 = vrot.slane %v1037, %v1045
        %v1049 = vadd.f32 %v1005, %v1042
        %v1050 = vadd.f32 %v1006, %v1046
        %v1051 = vadd.f32 %v1007, %v1042
        %v1052 = vadd.f32 %v1008, %v1046
        %v1053 = vadd.f32 %v1009, %v1042
        %v1054 = vadd.f32 %v1010, %v1046
        %v1055 = vadd.f32 %v1011, %v1042
        %v1056 = vadd.f32 %v1012, %v1046
        %v1057 = vadd.f32 %v1013, %v1042
        %v1058 = vadd.f32 %v1014, %v1046
        %v1059 = vadd.f32 %v1015, %v1042
        %v1060 = vadd.f32 %v1016, %v1046
        %v1061 = vadd.f32 %v1017, %v1042
        %v1062 = vadd.f32 %v1018, %v1046
        %v1063 = vadd.f32 %v1019, %v1042
        %v1064 = vadd.f32 %v1020, %v1046
        %v1065 = vadd.f32 %v1021, %v1042
        %v1066 = vadd.f32 %v1022, %v1046
        %v1067 = vadd.f32 %v1023, %v1042
        %v1068 = vadd.f32 %v1024, %v1046
        %v1069 = vadd.f32 %v1025, %v1042
        %v1070 = vadd.f32 %v1026, %v1046
        %v1071 = vadd.f32 %v1027, %v1042
        %v1072 = vadd.f32 %v1028, %v1046
        %v1073 = vadd.f32 %v1029, %v1042
        %v1074 = vadd.f32 %v1030, %v1046
        %v1075 = vadd.f32 %v1031, %v1042
        %v1076 = vadd.f32 %v1032, %v1046
        %v1077 = vadd.f32 %v1033, %v1042
        %v1078 = vadd.f32 %v1034, %v1046
        %v1079 = vadd.f32 %v1035, %v1042
        %v1080 = vadd.f32 %v1036, %v1046
        %v1081 = vsub.f32 0.0, %v1049
        %v1082 = vsub.f32 0.0, %v1051
        %v1083 = vsub.f32 0.0, %v1053
        %v1084 = vsub.f32 0.0, %v1055
        %v1085 = vsub.f32 0.0, %v1057
        %v1086 = vsub.f32 0.0, %v1059
        %v1087 = vsub.f32 0.0, %v1061
        %v1088 = vsub.f32 0.0, %v1063
        %v1089 = vsub.f32 0.0, %v1065
        %v1090 = vsub.f32 0.0, %v1067
        %v1091 = vsub.f32 0.0, %v1069
        %v1092 = vsub.f32 0.0, %v1071
        %v1093 = vsub.f32 0.0, %v1073
        %v1094 = vsub.f32 0.0, %v1075
        %v1095 = vsub.f32 0.0, %v1077
        %v1096 = vsub.f32 0.0, %v1079
        %v1097 = vmul.f32 %v1081, 1.442695
        %v1098 = vpow.pop %v1097
        %v1099 = vmul.f32 %v1082, 1.442695
        %v1100 = vpow.pop %v1099
        %v1101 = vmul.f32 %v1083, 1.442695
        %v1102 = vpow.pop %v1101
        %v1103 = vmul.f32 %v1084, 1.442695
        %v1104 = vpow.pop %v1103
        %v1105 = vmul.f32 %v1085, 1.442695
        %v1106 = vpow.pop %v1105
        %v1107 = vmul.f32 %v1086, 1.442695
        %v1108 = vpow.pop %v1107
        %v1109 = vmul.f32 %v1087, 1.442695
        %v1110 = vpow.pop %v1109
        %v1111 = vmul.f32 %v1088, 1.442695
        %v1112 = vpow.pop %v1111
        %v1113 = vmul.f32 %v1089, 1.442695
        %v1114 = vpow.pop %v1113
        %v1115 = vmul.f32 %v1090, 1.442695
        %v1116 = vpow.pop %v1115
        %v1117 = vmul.f32 %v1091, 1.442695
        %v1118 = vpow.pop %v1117
        %v1119 = vmul.f32 %v1092, 1.442695
        %v1120 = vpow.pop %v1119
        %v1121 = vmul.f32 %v1093, 1.442695
        %v1122 = vpow.pop %v1121
        %v1123 = vmul.f32 %v1094, 1.442695
        %v1124 = vpow.pop %v1123
        %v1125 = vmul.f32 %v1095, 1.442695
        %v1126 = vpow.pop %v1125
        %v1127 = vmul.f32 %v1096, 1.442695
        %v1128 = vpow.pop %v1127
        %v1129 = vadd.f32 %v1098, 1.0
        %v1130 = vadd.f32 %v1100, 1.0
        %v1131 = vadd.f32 %v1102, 1.0
        %v1132 = vadd.f32 %v1104, 1.0
        %v1133 = vadd.f32 %v1106, 1.0
        %v1134 = vadd.f32 %v1108, 1.0
        %v1135 = vadd.f32 %v1110, 1.0
        %v1136 = vadd.f32 %v1112, 1.0
        %v1137 = vadd.f32 %v1114, 1.0
        %v1138 = vadd.f32 %v1116, 1.0
        %v1139 = vadd.f32 %v1118, 1.0
        %v1140 = vadd.f32 %v1120, 1.0
        %v1141 = vadd.f32 %v1122, 1.0
        %v1142 = vadd.f32 %v1124, 1.0
        %v1143 = vadd.f32 %v1126, 1.0
        %v1144 = vadd.f32 %v1128, 1.0
        %v1145 = vrcp.pop %v1129
        %v1146 = vmul.f32 1.0, %v1145
        %v1147 = vrcp.pop %v1130
        %v1148 = vmul.f32 1.0, %v1147
        %v1149 = vrcp.pop %v1131
        %v1150 = vmul.f32 1.0, %v1149
        %v1151 = vrcp.pop %v1132
        %v1152 = vmul.f32 1.0, %v1151
        %v1153 = vrcp.pop %v1133
        %v1154 = vmul.f32 1.0, %v1153
        %v1155 = vrcp.pop %v1134
        %v1156 = vmul.f32 1.0, %v1155
        %v1157 = vrcp.pop %v1135
        %v1158 = vmul.f32 1.0, %v1157
        %v1159 = vrcp.pop %v1136
        %v1160 = vmul.f32 1.0, %v1159
        %v1161 = vrcp.pop %v1137
        %v1162 = vmul.f32 1.0, %v1161
        %v1163 = vrcp.pop %v1138
        %v1164 = vmul.f32 1.0, %v1163
        %v1165 = vrcp.pop %v1139
        %v1166 = vmul.f32 1.0, %v1165
        %v1167 = vrcp.pop %v1140
        %v1168 = vmul.f32 1.0, %v1167
        %v1169 = vrcp.pop %v1141
        %v1170 = vmul.f32 1.0, %v1169
        %v1171 = vrcp.pop %v1142
        %v1172 = vmul.f32 1.0, %v1171
        %v1173 = vrcp.pop %v1143
        %v1174 = vmul.f32 1.0, %v1173
        %v1175 = vrcp.pop %v1144
        %v1176 = vmul.f32 1.0, %v1175
        %v1177 = vmax.f32 %v1050, 0.0
        %v1178 = vmax.f32 %v1052, 0.0
        %v1179 = vmax.f32 %v1054, 0.0
        %v1180 = vmax.f32 %v1056, 0.0
        %v1181 = vmax.f32 %v1058, 0.0
        %v1182 = vmax.f32 %v1060, 0.0
        %v1183 = vmax.f32 %v1062, 0.0
        %v1184 = vmax.f32 %v1064, 0.0
        %v1185 = vmax.f32 %v1066, 0.0
        %v1186 = vmax.f32 %v1068, 0.0
        %v1187 = vmax.f32 %v1070, 0.0
        %v1188 = vmax.f32 %v1072, 0.0
        %v1189 = vmax.f32 %v1074, 0.0
        %v1190 = vmax.f32 %v1076, 0.0
        %v1191 = vmax.f32 %v1078, 0.0
        %v1192 = vmax.f32 %v1080, 0.0
        %v1193 = vand.u32 2147483647, %v1050
        %v1194 = vand.u32 2147483647, %v1052
        %v1195 = vand.u32 2147483647, %v1054
        %v1196 = vand.u32 2147483647, %v1056
        %v1197 = vand.u32 2147483647, %v1058
        %v1198 = vand.u32 2147483647, %v1060
        %v1199 = vand.u32 2147483647, %v1062
        %v1200 = vand.u32 2147483647, %v1064
        %v1201 = vand.u32 2147483647, %v1066
        %v1202 = vand.u32 2147483647, %v1068
        %v1203 = vand.u32 2147483647, %v1070
        %v1204 = vand.u32 2147483647, %v1072
        %v1205 = vand.u32 2147483647, %v1074
        %v1206 = vand.u32 2147483647, %v1076
        %v1207 = vand.u32 2147483647, %v1078
        %v1208 = vand.u32 2147483647, %v1080
        %v1209 = vsub.f32 0.0, %v1193
        %v1210 = vsub.f32 0.0, %v1194
        %v1211 = vsub.f32 0.0, %v1195
        %v1212 = vsub.f32 0.0, %v1196
        %v1213 = vsub.f32 0.0, %v1197
        %v1214 = vsub.f32 0.0, %v1198
        %v1215 = vsub.f32 0.0, %v1199
        %v1216 = vsub.f32 0.0, %v1200
        %v1217 = vsub.f32 0.0, %v1201
        %v1218 = vsub.f32 0.0, %v1202
        %v1219 = vsub.f32 0.0, %v1203
        %v1220 = vsub.f32 0.0, %v1204
        %v1221 = vsub.f32 0.0, %v1205
        %v1222 = vsub.f32 0.0, %v1206
        %v1223 = vsub.f32 0.0, %v1207
        %v1224 = vsub.f32 0.0, %v1208
        %v1225 = vmul.f32 %v1209, 1.442695
        %v1226 = vpow.pop %v1225
        %v1227 = vmul.f32 %v1210, 1.442695
        %v1228 = vpow.pop %v1227
        %v1229 = vmul.f32 %v1211, 1.442695
        %v1230 = vpow.pop %v1229
        %v1231 = vmul.f32 %v1212, 1.442695
        %v1232 = vpow.pop %v1231
        %v1233 = vmul.f32 %v1213, 1.442695
        %v1234 = vpow.pop %v1233
        %v1235 = vmul.f32 %v1214, 1.442695
        %v1236 = vpow.pop %v1235
        %v1237 = vmul.f32 %v1215, 1.442695
        %v1238 = vpow.pop %v1237
        %v1239 = vmul.f32 %v1216, 1.442695
        %v1240 = vpow.pop %v1239
        %v1241 = vmul.f32 %v1217, 1.442695
        %v1242 = vpow.pop %v1241
        %v1243 = vmul.f32 %v1218, 1.442695
        %v1244 = vpow.pop %v1243
        %v1245 = vmul.f32 %v1219, 1.442695
        %v1246 = vpow.pop %v1245
        %v1247 = vmul.f32 %v1220, 1.442695
        %v1248 = vpow.pop %v1247
        %v1249 = vmul.f32 %v1221, 1.442695
        %v1250 = vpow.pop %v1249
        %v1251 = vmul.f32 %v1222, 1.442695
        %v1252 = vpow.pop %v1251
        %v1253 = vmul.f32 %v1223, 1.442695
        %v1254 = vpow.pop %v1253
        %v1255 = vmul.f32 %v1224, 1.442695
        %v1256 = vpow.pop %v1255
        %v1257 = vadd.f32 %v1226, 1.0
        %v1258 = vadd.f32 %v1228, 1.0
        %v1259 = vadd.f32 %v1230, 1.0
        %v1260 = vadd.f32 %v1232, 1.0
        %v1261 = vadd.f32 %v1234, 1.0
        %v1262 = vadd.f32 %v1236, 1.0
        %v1263 = vadd.f32 %v1238, 1.0
        %v1264 = vadd.f32 %v1240, 1.0
        %v1265 = vadd.f32 %v1242, 1.0
        %v1266 = vadd.f32 %v1244, 1.0
        %v1267 = vadd.f32 %v1246, 1.0
        %v1268 = vadd.f32 %v1248, 1.0
        %v1269 = vadd.f32 %v1250, 1.0
        %v1270 = vadd.f32 %v1252, 1.0
        %v1271 = vadd.f32 %v1254, 1.0
        %v1272 = vadd.f32 %v1256, 1.0
        %v1273 = vlog2.pop %v1257
        %v1274 = vmul.f32 %v1273, 0.6931472
        %v1275 = vlog2.pop %v1258
        %v1276 = vmul.f32 %v1275, 0.6931472
        %v1277 = vlog2.pop %v1259
        %v1278 = vmul.f32 %v1277, 0.6931472
        %v1279 = vlog2.pop %v1260
        %v1280 = vmul.f32 %v1279, 0.6931472
        %v1281 = vlog2.pop %v1261
        %v1282 = vmul.f32 %v1281, 0.6931472
        %v1283 = vlog2.pop %v1262
        %v1284 = vmul.f32 %v1283, 0.6931472
        %v1285 = vlog2.pop %v1263
        %v1286 = vmul.f32 %v1285, 0.6931472
        %v1287 = vlog2.pop %v1264
        %v1288 = vmul.f32 %v1287, 0.6931472
        %v1289 = vlog2.pop %v1265
        %v1290 = vmul.f32 %v1289, 0.6931472
        %v1291 = vlog2.pop %v1266
        %v1292 = vmul.f32 %v1291, 0.6931472
        %v1293 = vlog2.pop %v1267
        %v1294 = vmul.f32 %v1293, 0.6931472
        %v1295 = vlog2.pop %v1268
        %v1296 = vmul.f32 %v1295, 0.6931472
        %v1297 = vlog2.pop %v1269
        %v1298 = vmul.f32 %v1297, 0.6931472
        %v1299 = vlog2.pop %v1270
        %v1300 = vmul.f32 %v1299, 0.6931472
        %v1301 = vlog2.pop %v1271
        %v1302 = vmul.f32 %v1301, 0.6931472
        %v1303 = vlog2.pop %v1272
        %v1304 = vmul.f32 %v1303, 0.6931472
        %v1305 = vadd.f32 %v1177, %v1274
        %v1306 = vadd.f32 %v1178, %v1276
        %v1307 = vadd.f32 %v1179, %v1278
        %v1308 = vadd.f32 %v1180, %v1280
        %v1309 = vadd.f32 %v1181, %v1282
        %v1310 = vadd.f32 %v1182, %v1284
        %v1311 = vadd.f32 %v1183, %v1286
        %v1312 = vadd.f32 %v1184, %v1288
        %v1313 = vadd.f32 %v1185, %v1290
        %v1314 = vadd.f32 %v1186, %v1292
        %v1315 = vadd.f32 %v1187, %v1294
        %v1316 = vadd.f32 %v1188, %v1296
        %v1317 = vadd.f32 %v1189, %v1298
        %v1318 = vadd.f32 %v1190, %v1300
        %v1319 = vadd.f32 %v1191, %v1302
        %v1320 = vadd.f32 %v1192, %v1304
        %v1321 = vmul.f32 %v1146, %v1305
        %v1322 = vmul.f32 %v1148, %v1306
        %v1323 = vmul.f32 %v1150, %v1307
        %v1324 = vmul.f32 %v1152, %v1308
        %v1325 = vmul.f32 %v1154, %v1309
        %v1326 = vmul.f32 %v1156, %v1310
        %v1327 = vmul.f32 %v1158, %v1311
        %v1328 = vmul.f32 %v1160, %v1312
        %v1329 = vmul.f32 %v1162, %v1313
        %v1330 = vmul.f32 %v1164, %v1314
        %v1331 = vmul.f32 %v1166, %v1315
        %v1332 = vmul.f32 %v1168, %v1316
        %v1333 = vmul.f32 %v1170, %v1317
        %v1334 = vmul.f32 %v1172, %v1318
        %v1335 = vmul.f32 %v1174, %v1319
        %v1336 = vmul.f32 %v1176, %v1320
        %1337 = vst [vmem:[#allocation5] sm:$0xff] %v1321
        %1338 = vst [vmem:[#allocation5 + $0x8] sm:$0xff] %v1322
        %1339 = vst [vmem:[#allocation5 + $0x10] sm:$0xff] %v1323
        %1340 = vst [vmem:[#allocation5 + $0x18] sm:$0xff] %v1324
        %1341 = vst [vmem:[#allocation5 + $0x20] sm:$0xff] %v1325
        %1342 = vst [vmem:[#allocation5 + $0x28] sm:$0xff] %v1326
        %1343 = vst [vmem:[#allocation5 + $0x30] sm:$0xff] %v1327
        %1344 = vst [vmem:[#allocation5 + $0x38] sm:$0xff] %v1328
        %1345 = vst [vmem:[#allocation5 + $0x40] sm:$0xff] %v1329
        %1346 = vst [vmem:[#allocation5 + $0x48] sm:$0xff] %v1330
        %1347 = vst [vmem:[#allocation5 + $0x50] sm:$0xff] %v1331
        %1348 = vst [vmem:[#allocation5 + $0x58] sm:$0xff] %v1332
        %1349 = vst [vmem:[#allocation5 + $0x60] sm:$0xff] %v1333
        %1350 = vst [vmem:[#allocation5 + $0x68] sm:$0xff] %v1334
        %1351 = vst [vmem:[#allocation5 + $0x70] sm:$0xff] %v1335
        %1352 = vst [vmem:[#allocation5 + $0x78] sm:$0xff] %v1336
        loop: start=0, step=1, limit=128
        $region64: #{cgconv_block.1} parent=51 // loop_pre_header
          _
        $region65: #{cgconv_block.1} parent=51 // loop_header
          %s1354 = sphi 0, %s1358
          %p1355 = scmp.ge.s32.totalorder %s1354, 128
        $region66: #{cgconv_block.1} parent=51 // loop_header_branch
          %1357 = sbr.rel (%p1355) target = $region70
        $region67: #{cgconv_block.1} parent=51 // loop_body
          %s1359 = sadd.s32 %s306, %s1354
          %s1360 = sld [smem:[#allocation8 + %s1359]]
          %s1361 = scalar_lea.vmem [#allocation2], %s1360
          %v1362 = vld [vmem:[%s1361] sm:$0x1]
          %s1363 = scalar_lea.vmem [#allocation5], %s1354
          %v1364 = vld [vmem:[%s1363] sm:$0x1]
          %v1365 = vadd.f32 %v1362, %v1364
          %1366 = vst [vmem:[%s1361] sm:$0x1] %v1365
        $region68: #{cgconv_block.1} parent=51 // loop_footer
          %s1358 = sadd.s32 1, %s1354
        $region69: #{cgconv_block.1} parent=51 // loop_footer_branch
          %1353 = sbr.rel target = $region65
        $region70: #{cgconv_block.1} parent=51 // loop_exit
          _
        %p1367 = scmp.eq.s32.totalorder %s32, 3
        // Predicated region
        $region71: #{cgconv_block.1} parent=51 // pred_check
          %p1368 = pneg %p1367
        $region72: #{cgconv_block.1} parent=51 // pred_check_branch
          %1370 = sbr.rel (%p1368) target = $region74
        $region73: #{cgconv_block.1} parent=51 // pred_region
          %v1371 = vld [vmem:[%s2] sm:$0xff]
          %v1372 = vld [vmem:[%s2 + $0x8] sm:$0xff]
          %v1373 = vld [vmem:[%s2 + $0x10] sm:$0xff]
          %v1374 = vld [vmem:[%s2 + $0x18] sm:$0xff]
          %v1375 = vld [vmem:[%s2 + $0x20] sm:$0xff]
          %v1376 = vld [vmem:[%s2 + $0x28] sm:$0xff]
          %v1377 = vld [vmem:[%s2 + $0x30] sm:$0xff]
          %v1378 = vld [vmem:[%s2 + $0x38] sm:$0xff]
          %v1379 = vld [vmem:[%s2 + $0x40] sm:$0xff]
          %v1380 = vld [vmem:[%s2 + $0x48] sm:$0xff]
          %v1381 = vld [vmem:[%s2 + $0x50] sm:$0xff]
          %v1382 = vld [vmem:[%s2 + $0x58] sm:$0xff]
          %v1383 = vld [vmem:[%s2 + $0x60] sm:$0xff]
          %v1384 = vld [vmem:[%s2 + $0x68] sm:$0xff]
          %v1385 = vld [vmem:[%s2 + $0x70] sm:$0xff]
          %v1386 = vld [vmem:[%s2 + $0x78] sm:$0xff]
          %v1387 = vld [vmem:[#allocation2] sm:$0xff]
          %v1388 = vld [vmem:[#allocation2 + $0x8] sm:$0xff]
          %v1389 = vld [vmem:[#allocation2 + $0x10] sm:$0xff]
          %v1390 = vld [vmem:[#allocation2 + $0x18] sm:$0xff]
          %v1391 = vld [vmem:[#allocation2 + $0x20] sm:$0xff]
          %v1392 = vld [vmem:[#allocation2 + $0x28] sm:$0xff]
          %v1393 = vld [vmem:[#allocation2 + $0x30] sm:$0xff]
          %v1394 = vld [vmem:[#allocation2 + $0x38] sm:$0xff]
          %v1395 = vld [vmem:[#allocation2 + $0x40] sm:$0xff]
          %v1396 = vld [vmem:[#allocation2 + $0x48] sm:$0xff]
          %v1397 = vld [vmem:[#allocation2 + $0x50] sm:$0xff]
          %v1398 = vld [vmem:[#allocation2 + $0x58] sm:$0xff]
          %v1399 = vld [vmem:[#allocation2 + $0x60] sm:$0xff]
          %v1400 = vld [vmem:[#allocation2 + $0x68] sm:$0xff]
          %v1401 = vld [vmem:[#allocation2 + $0x70] sm:$0xff]
          %v1402 = vld [vmem:[#allocation2 + $0x78] sm:$0xff]
          %v1403 = vadd.f32 %v1371, %v1387
          %v1404 = vadd.f32 %v1372, %v1388
          %v1405 = vadd.f32 %v1373, %v1389
          %v1406 = vadd.f32 %v1374, %v1390
          %v1407 = vadd.f32 %v1375, %v1391
          %v1408 = vadd.f32 %v1376, %v1392
          %v1409 = vadd.f32 %v1377, %v1393
          %v1410 = vadd.f32 %v1378, %v1394
          %v1411 = vadd.f32 %v1379, %v1395
          %v1412 = vadd.f32 %v1380, %v1396
          %v1413 = vadd.f32 %v1381, %v1397
          %v1414 = vadd.f32 %v1382, %v1398
          %v1415 = vadd.f32 %v1383, %v1399
          %v1416 = vadd.f32 %v1384, %v1400
          %v1417 = vadd.f32 %v1385, %v1401
          %v1418 = vadd.f32 %v1386, %v1402
          %v1419 = vld [vmem:[%s8] sm:$0xff]
          %v1420 = vld [vmem:[%s8 + $0x8] sm:$0xff]
          %v1421 = vld [vmem:[%s8 + $0x10] sm:$0xff]
          %v1422 = vld [vmem:[%s8 + $0x18] sm:$0xff]
          %v1423 = vld [vmem:[%s8 + $0x20] sm:$0xff]
          %v1424 = vld [vmem:[%s8 + $0x28] sm:$0xff]
          %v1425 = vld [vmem:[%s8 + $0x30] sm:$0xff]
          %v1426 = vld [vmem:[%s8 + $0x38] sm:$0xff]
          %v1427 = vld [vmem:[%s8 + $0x40] sm:$0xff]
          %v1428 = vld [vmem:[%s8 + $0x48] sm:$0xff]
          %v1429 = vld [vmem:[%s8 + $0x50] sm:$0xff]
          %v1430 = vld [vmem:[%s8 + $0x58] sm:$0xff]
          %v1431 = vld [vmem:[%s8 + $0x60] sm:$0xff]
          %v1432 = vld [vmem:[%s8 + $0x68] sm:$0xff]
          %v1433 = vld [vmem:[%s8 + $0x70] sm:$0xff]
          %v1434 = vld [vmem:[%s8 + $0x78] sm:$0xff]
          %v1435 = vld [vmem:[%s9] sm:$0x1]
          %v1437 = vlaneseq
          %v1438 = vshrl.u32 %v1437, 7
          %v1439 = vsub.s32 0, %v1438
          %v1440 = vrot.slane %v1435, %v1439
          %1442 = vmatprep.subr.mxu0 0.0
          %1443 = vmatpush1.msra.mxu0 %v1419
          %1444 = vmatprep.subr.mxu0 0.0
          %1445 = vmatpush1.msra.mxu0 %v1420
          %1446 = vmatprep.subr.mxu0 0.0
          %1447 = vmatpush1.msra.mxu0 %v1421
          %1448 = vmatprep.subr.mxu0 0.0
          %1449 = vmatpush1.msra.mxu0 %v1422
          %1450 = vmatprep.subr.mxu0 0.0
          %1451 = vmatpush1.msra.mxu0 %v1423
          %1452 = vmatprep.subr.mxu0 0.0
          %1453 = vmatpush1.msra.mxu0 %v1424
          %1454 = vmatprep.subr.mxu0 0.0
          %1455 = vmatpush1.msra.mxu0 %v1425
          %1456 = vmatprep.subr.mxu0 0.0
          %1457 = vmatpush1.msra.mxu0 %v1426
          %1458 = vmatprep.subr.mxu0 0.0
          %1459 = vmatpush1.msra.mxu0 %v1427
          %1460 = vmatprep.subr.mxu0 0.0
          %1461 = vmatpush1.msra.mxu0 %v1428
          %1462 = vmatprep.subr.mxu0 0.0
          %1463 = vmatpush1.msra.mxu0 %v1429
          %1464 = vmatprep.subr.mxu0 0.0
          %1465 = vmatpush1.msra.mxu0 %v1430
          %1466 = vmatprep.subr.mxu0 0.0
          %1467 = vmatpush1.msra.mxu0 %v1431
          %1468 = vmatprep.subr.mxu0 0.0
          %1469 = vmatpush1.msra.mxu0 %v1432
          %1470 = vmatprep.subr.mxu0 0.0
          %1471 = vmatpush1.msra.mxu0 %v1433
          %1472 = vmatprep.subr.mxu0 0.0
          %1473 = vmatpush1.msra.mxu0 %v1434
          %1474 = vmatprep.subr.mxu0 0.0
          %1475 = vmatpush1.msra.mxu0 0.0
          %1476 = vmatprep.subr.mxu0 0.0
          %1477 = vmatpush1.msra.mxu0 0.0
          %1478 = vmatprep.subr.mxu0 0.0
          %1479 = vmatpush1.msra.mxu0 0.0
          %1480 = vmatprep.subr.mxu0 0.0
          %1481 = vmatpush1.msra.mxu0 0.0
          %1482 = vmatprep.subr.mxu0 0.0
          %1483 = vmatpush1.msra.mxu0 0.0
          %1484 = vmatprep.subr.mxu0 0.0
          %1485 = vmatpush1.msra.mxu0 0.0
          %1486 = vmatprep.subr.mxu0 0.0
          %1487 = vmatpush1.msra.mxu0 0.0
          %1488 = vmatprep.subr.mxu0 0.0
          %1489 = vmatpush1.msra.mxu0 0.0
          %1490 = vmatprep.subr.mxu0 0.0
          %1491 = vmatpush1.msra.mxu0 0.0
          %1492 = vmatprep.subr.mxu0 0.0
          %1493 = vmatpush1.msra.mxu0 0.0
          %1494 = vmatprep.subr.mxu0 0.0
          %1495 = vmatpush1.msra.mxu0 0.0
          %1496 = vmatprep.subr.mxu0 0.0
          %1497 = vmatpush1.msra.mxu0 0.0
          %1498 = vmatprep.subr.mxu0 0.0
          %1499 = vmatpush1.msra.mxu0 0.0
          %1500 = vmatprep.subr.mxu0 0.0
          %1501 = vmatpush1.msra.mxu0 0.0
          %1502 = vmatprep.subr.mxu0 0.0
          %1503 = vmatpush1.msra.mxu0 0.0
          %1504 = vmatprep.subr.mxu0 0.0
          %1505 = vmatpush1.msra.mxu0 0.0
          %1506 = vmatprep.mubr.f32.mxu0 0.0
          %1507 = vmatmul.mubr.f32.gmra.mrb[0].mxu0 %v1403
          %v1508 = vpop.f32.mrb[0].mxu0
          %v1509 = vadd.f32 %v1440, %v1508
          %v1510 = vpop.f32.mrb[0].mxu0
          %1511 = vmatprep.mubr.f32.mxu0 0.0
          %1512 = vmatmul.mubr.f32.gmra.mrb[0].mxu0 %v1404
          %v1513 = vpop.f32.mrb[0].mxu0
          %v1514 = vadd.f32 %v1440, %v1513
          %v1515 = vpop.f32.mrb[0].mxu0
          %1516 = vmatprep.mubr.f32.mxu0 0.0
          %1517 = vmatmul.mubr.f32.gmra.mrb[0].mxu0 %v1405
          %v1518 = vpop.f32.mrb[0].mxu0
          %v1519 = vadd.f32 %v1440, %v1518
          %v1520 = vpop.f32.mrb[0].mxu0
          %1521 = vmatprep.mubr.f32.mxu0 0.0
          %1522 = vmatmul.mubr.f32.gmra.mrb[0].mxu0 %v1406
          %v1523 = vpop.f32.mrb[0].mxu0
          %v1524 = vadd.f32 %v1440, %v1523
          %v1525 = vpop.f32.mrb[0].mxu0
          %1526 = vmatprep.mubr.f32.mxu0 0.0
          %1527 = vmatmul.mubr.f32.gmra.mrb[0].mxu0 %v1407
          %v1528 = vpop.f32.mrb[0].mxu0
          %v1529 = vadd.f32 %v1440, %v1528
          %v1530 = vpop.f32.mrb[0].mxu0
          %1531 = vmatprep.mubr.f32.mxu0 0.0
          %1532 = vmatmul.mubr.f32.gmra.mrb[0].mxu0 %v1408
          %v1533 = vpop.f32.mrb[0].mxu0
          %v1534 = vadd.f32 %v1440, %v1533
          %v1535 = vpop.f32.mrb[0].mxu0
          %1536 = vmatprep.mubr.f32.mxu0 0.0
          %1537 = vmatmul.mubr.f32.gmra.mrb[0].mxu0 %v1409
          %v1538 = vpop.f32.mrb[0].mxu0
          %v1539 = vadd.f32 %v1440, %v1538
          %v1540 = vpop.f32.mrb[0].mxu0
          %1541 = vmatprep.mubr.f32.mxu0 0.0
          %1542 = vmatmul.mubr.f32.gmra.mrb[0].mxu0 %v1410
          %v1543 = vpop.f32.mrb[0].mxu0
          %v1544 = vadd.f32 %v1440, %v1543
          %v1545 = vpop.f32.mrb[0].mxu0
          %1546 = vmatprep.mubr.f32.mxu0 0.0
          %1547 = vmatmul.mubr.f32.gmra.mrb[0].mxu0 %v1411
          %v1548 = vpop.f32.mrb[0].mxu0
          %v1549 = vadd.f32 %v1440, %v1548
          %v1550 = vpop.f32.mrb[0].mxu0
          %1551 = vmatprep.mubr.f32.mxu0 0.0
          %1552 = vmatmul.mubr.f32.gmra.mrb[0].mxu0 %v1412
          %v1553 = vpop.f32.mrb[0].mxu0
          %v1554 = vadd.f32 %v1440, %v1553
          %v1555 = vpop.f32.mrb[0].mxu0
          %1556 = vmatprep.mubr.f32.mxu0 0.0
          %1557 = vmatmul.mubr.f32.gmra.mrb[0].mxu0 %v1413
          %v1558 = vpop.f32.mrb[0].mxu0
          %v1559 = vadd.f32 %v1440, %v1558
          %v1560 = vpop.f32.mrb[0].mxu0
          %1561 = vmatprep.mubr.f32.mxu0 0.0
          %1562 = vmatmul.mubr.f32.gmra.mrb[0].mxu0 %v1414
          %v1563 = vpop.f32.mrb[0].mxu0
          %v1564 = vadd.f32 %v1440, %v1563
          %v1565 = vpop.f32.mrb[0].mxu0
          %1566 = vmatprep.mubr.f32.mxu0 0.0
          %1567 = vmatmul.mubr.f32.gmra.mrb[0].mxu0 %v1415
          %v1568 = vpop.f32.mrb[0].mxu0
          %v1569 = vadd.f32 %v1440, %v1568
          %v1570 = vpop.f32.mrb[0].mxu0
          %1571 = vmatprep.mubr.f32.mxu0 0.0
          %1572 = vmatmul.mubr.f32.gmra.mrb[0].mxu0 %v1416
          %v1573 = vpop.f32.mrb[0].mxu0
          %v1574 = vadd.f32 %v1440, %v1573
          %v1575 = vpop.f32.mrb[0].mxu0
          %1576 = vmatprep.mubr.f32.mxu0 0.0
          %1577 = vmatmul.mubr.f32.gmra.mrb[0].mxu0 %v1417
          %v1578 = vpop.f32.mrb[0].mxu0
          %v1579 = vadd.f32 %v1440, %v1578
          %v1580 = vpop.f32.mrb[0].mxu0
          %1581 = vmatprep.mubr.f32.mxu0 0.0
          %1582 = vmatmul.mubr.f32.gmra.mrb[0].mxu0 %v1418
          %v1583 = vpop.f32.mrb[0].mxu0
          %v1584 = vadd.f32 %v1440, %v1583
          %v1585 = vpop.f32.mrb[0].mxu0
          %1586 = vdwg.mxu0
          %v1587 = vmax.f32 %v1509, 0.0
          %v1588 = vmax.f32 %v1514, 0.0
          %v1589 = vmax.f32 %v1519, 0.0
          %v1590 = vmax.f32 %v1524, 0.0
          %v1591 = vmax.f32 %v1529, 0.0
          %v1592 = vmax.f32 %v1534, 0.0
          %v1593 = vmax.f32 %v1539, 0.0
          %v1594 = vmax.f32 %v1544, 0.0
          %v1595 = vmax.f32 %v1549, 0.0
          %v1596 = vmax.f32 %v1554, 0.0
          %v1597 = vmax.f32 %v1559, 0.0
          %v1598 = vmax.f32 %v1564, 0.0
          %v1599 = vmax.f32 %v1569, 0.0
          %v1600 = vmax.f32 %v1574, 0.0
          %v1601 = vmax.f32 %v1579, 0.0
          %v1602 = vmax.f32 %v1584, 0.0
          %1603 = vst [vmem:[#allocation9] sm:$0xff] %v1587
          %1604 = vst [vmem:[#allocation9 + $0x8] sm:$0xff] %v1588
          %1605 = vst [vmem:[#allocation9 + $0x10] sm:$0xff] %v1589
          %1606 = vst [vmem:[#allocation9 + $0x18] sm:$0xff] %v1590
          %1607 = vst [vmem:[#allocation9 + $0x20] sm:$0xff] %v1591
          %1608 = vst [vmem:[#allocation9 + $0x28] sm:$0xff] %v1592
          %1609 = vst [vmem:[#allocation9 + $0x30] sm:$0xff] %v1593
          %1610 = vst [vmem:[#allocation9 + $0x38] sm:$0xff] %v1594
          %1611 = vst [vmem:[#allocation9 + $0x40] sm:$0xff] %v1595
          %1612 = vst [vmem:[#allocation9 + $0x48] sm:$0xff] %v1596
          %1613 = vst [vmem:[#allocation9 + $0x50] sm:$0xff] %v1597
          %1614 = vst [vmem:[#allocation9 + $0x58] sm:$0xff] %v1598
          %1615 = vst [vmem:[#allocation9 + $0x60] sm:$0xff] %v1599
          %1616 = vst [vmem:[#allocation9 + $0x68] sm:$0xff] %v1600
          %1617 = vst [vmem:[#allocation9 + $0x70] sm:$0xff] %v1601
          %1618 = vst [vmem:[#allocation9 + $0x78] sm:$0xff] %v1602
        $region74: #{cgconv_block.1} parent=51 // pred_fallthru
          _
        // Predicated region
        $region75: #{cgconv_block.1} parent=51 // pred_check
          %p1619 = pneg %p218
        $region76: #{cgconv_block.1} parent=51 // pred_check_branch
          %1621 = sbr.rel (%p1619) target = $region78
        $region77: #{cgconv_block.1} parent=51 // pred_region
          %s1623 = ssub.s32 2048, 2048
          %1624 = vsyncadd [#allocation10], %s1623
          %s1625 = sshll.u32 [#allocation9], 4
          %s1626 = int_to_ptr.vmem [resolvable:$true] %s1625
          %1631 = dma.vmem_to_hbm [thread:$0]  %s1626, 2048, %s10, [#allocation10], 128, 128, 8
        $region78: #{cgconv_block.1} parent=51 // pred_fallthru
          _
        // Predicated region
        $region79: #{cgconv_block.1} parent=51 // pred_check
          %p1632 = pneg %p218
        $region80: #{cgconv_block.1} parent=51 // pred_check_branch
          %1634 = sbr.rel (%p1632) target = $region82
        $region81: #{cgconv_block.1} parent=51 // pred_region
          %1635 = dma.done [#allocation10], 2048
        $region82: #{cgconv_block.1} parent=51 // pred_fallthru
          _
      $region52: #{cgconv_block.1} parent=5 // pred_fallthru
        _
      %p1636 = scmp.le.s32.totalorder 2, %s27
      // Predicated region
      $region83: #{cgconv_block.1} parent=5 // pred_check
        %p1637 = pneg %p1636
      $region84: #{cgconv_block.1} parent=5 // pred_check_branch
        %1639 = sbr.rel (%p1637) target = $region86
      $region85: #{cgconv_block.1} parent=5 // pred_region
        %s1640 = ssub.s32 %s27, 2
      $region86: #{cgconv_block.1} parent=5 // pred_fallthru
        _
    $region6: #{cgconv_block.1} parent=1 // loop_footer
      %s31 = sadd.s32 1, %s27
    $region7: #{cgconv_block.1} parent=1 // loop_footer_branch
      %26 = sbr.rel target = $region3
    $region8: #{cgconv_block.1} parent=1 // loop_exit
      _
    %1641 = vsyncpa [#allocation10], 1
    %s1642 = scalar_lea.sflag [#allocation10], 1
    %1643 = vsyncpa %s1642, 1

</llo_original>
